<compile_context>
chip_gen: v7x
topology: tpu7x:2x2x1
jax: 0.10.0
libtpu: 0.0.40
codegen_flags: <defaults>
</compile_context>

<pallas_src>
import math
import functools

import jax
import jax.numpy as jnp
import numpy as np
from jax.experimental import pallas as pl
from jax.experimental.pallas import tpu as pltpu

_MIB = 1024 * 1024


# ----------------------------------------------------------------------------
# helpers
# ----------------------------------------------------------------------------
def _round_up(n, m):
    return ((n + m - 1) // m) * m


def _pick_tile(n, cap):
    """Largest multiple-of-8 divisor of n that is <= cap (n is a multiple of 8)."""
    t = min(n, cap)
    t -= t % 8
    while t > 8 and n % t != 0:
        t -= 8
    return max(t, 8)


def _choose_row_tile(rows, cap=256):
    """Row tile (multiple of 8) + padded row count; bounds padding waste."""
    rt = min(cap, _round_up(rows, 8))
    while rt > 64 and _round_up(rows, rt) - rows > rt // 2:
        rt //= 2
    return rt, _round_up(rows, rt)


def _vmem_limit_bytes():
    """Explicit scoped-VMEM limit (the 16/32 MiB default is far too low)."""
    try:
        cap = int(pltpu.get_tpu_info().vmem_capacity_bytes)
    except Exception:
        return 48 * _MIB                      # safe on every generation incl. v7x
    return int(min(100 * _MIB, max(cap * 3 // 4, 32 * _MIB)))


def _cores_per_chip():
    """v7x has 2 TensorCores per chip; v5e/v6e have 1 (perf heuristic only)."""
    try:
        kind = jax.devices()[0].device_kind.lower()
    except Exception:
        return 1
    return 2 if ("v7" in kind or "7x" in kind) else 1


def _sigmoid(x):
    # tanh-form sigmoid: a single EUP transcendental per gate instead of
    # exp + reciprocal; EUP is the saturating slot of the recurrence on v6e/v7x.
    return 0.5 * (jnp.tanh(0.5 * x) + 1.0)


def _stage2_vmem_bytes(tt, bt, hp):
    gates = tt * bt * 4 * hp * 2 * 2          # bf16 gate stream, double-buffered
    hout = tt * bt * hp * 2 * 2               # bf16 output, double-buffered
    whh = hp * 4 * hp * 2                     # bf16 weight, single-buffered
    h0c0 = 2 * (bt * hp * 4) * 2              # f32 h0/c0, double-buffered
    scr = 2 * bt * hp * 4                     # f32 h/c scratch
    return gates + hout + whh + h0c0 + scr


# ----------------------------------------------------------------------------
# Kernel A: hoisted input projection  gates = x @ W + b   (bf16 output)
# ----------------------------------------------------------------------------
def _affine_kernel(x_ref, w_ref, b_ref, o_ref):
    y = jnp.dot(x_ref[...], w_ref[...], preferred_element_type=jnp.float32)
    o_ref[...] = (y + b_ref[...]).astype(o_ref.dtype)


def _input_projection(x, w, b, out_dtype, row_tile, vmem_limit):
    rows, k = x.shape
    n = w.shape[1]
    return pl.pallas_call(
        _affine_kernel,
        out_shape=jax.ShapeDtypeStruct((rows, n), out_dtype),
        grid_spec=pltpu.PrefetchScalarGridSpec(
            num_scalar_prefetch=0,
            grid=(rows // row_tile,),
            in_specs=[
                pl.BlockSpec((row_tile, k), lambda i: (i, 0)),
                # grid-invariant weight/bias: single buffer (halves their VMEM)
                pl.BlockSpec((k, n), lambda i: (0, 0),
                             pipeline_mode=pl.Buffered(1)),
                pl.BlockSpec((1, n), lambda i: (0, 0),
                             pipeline_mode=pl.Buffered(1)),
            ],
            out_specs=pl.BlockSpec((row_tile, n), lambda i: (i, 0)),
        ),
        compiler_params=pltpu.CompilerParams(
            dimension_semantics=("parallel",),
            vmem_limit_bytes=vmem_limit,
        ),
    )(x, w, b)


# ----------------------------------------------------------------------------
# Kernel B: LSTM recurrence (only h @ W_hh + gate math on the serial axis).
# ----------------------------------------------------------------------------
def _lstm_recurrence_kernel(gates_ref, h0_ref, c0_ref, whh_ref, hout_ref,
                            h_scr, c_scr):
    @pl.when(pl.program_id(1) == 0)
    def _():
        h_scr[...] = h0_ref[...]
        c_scr[...] = c0_ref[...]

    hp = h_scr.shape[-1]              # padded hidden size (multiple of 128)
    tt = gates_ref.shape[0]           # timesteps per grid step (static)
    whh = whh_ref[...]                # (Hp, 4Hp), bf16, single-buffered
    mxu_dtype = whh.dtype

    h = h_scr[...]                    # f32 state
    c = c_scr[...]
    for i in range(tt):               # statically unrolled inner time loop
        g = gates_ref[i].astype(jnp.float32) + jnp.dot(
            h.astype(mxu_dtype), whh, preferred_element_type=jnp.float32)
        # PyTorch gate order: input, forget, cell (g), output; lane-aligned slices.
        i_g = _sigmoid(g[:, 0 * hp:1 * hp])
        f_g = _sigmoid(g[:, 1 * hp:2 * hp])
        g_g = jnp.tanh(g[:, 2 * hp:3 * hp])
        o_g = _sigmoid(g[:, 3 * hp:4 * hp])
        c = f_g * c + i_g * g_g
        h = o_g * jnp.tanh(c)
        hout_ref[i] = h.astype(hout_ref.dtype)   # lane-dense (bt, Hp) store

    h_scr[...] = h
    c_scr[...] = c


# ----------------------------------------------------------------------------
# Kernel C: vocab-tiled output projection with online LSE (log-softmax).
# Writes un-normalized f32 logits + per-row LSE; normalization is one fused
# elementwise pass outside.
# ----------------------------------------------------------------------------
def _affine_lse_kernel(x_ref, w_ref, b_ref, logit_ref, lse_ref, m_scr, l_scr,
                       *, valid_n):
    j = pl.program_id(1)

    @pl.when(j == 0)
    def _():
        m_scr[...] = jnp.full_like(m_scr, -jnp.inf)
        l_scr[...] = jnp.zeros_like(l_scr)

    vt = logit_ref.shape[-1]
    y = jnp.dot(x_ref[...], w_ref[...], preferred_element_type=jnp.float32)
    y = y + b_ref[...]
    # mask padded vocab columns explicitly (no -1e30 bias tricks)
    col = jax.lax.broadcasted_iota(jnp.int32, y.shape, 1) + j * vt
    y = jnp.where(col < valid_n, y, jnp.finfo(jnp.float32).min)
    logit_ref[...] = y

    m_prev = m_scr[...]
    m_new = jnp.maximum(m_prev, jnp.max(y, axis=-1, keepdims=True))
    l_scr[...] = l_scr[...] * jnp.exp(m_prev - m_new) + jnp.sum(
        jnp.exp(y - m_new), axis=-1, keepdims=True)
    m_scr[...] = m_new

    @pl.when(j == pl.num_programs(1) - 1)
    def _():
        lse_ref[...] = m_scr[...] + jnp.log(l_scr[...])


def _output_projection_lse(x, w, b, valid_n, row_tile, vocab_tile, vmem_limit):
    rows, k = x.shape
    n = w.shape[1]
    kernel = functools.partial(_affine_lse_kernel, valid_n=valid_n)
    return pl.pallas_call(
        kernel,
        out_shape=(jax.ShapeDtypeStruct((rows, n), jnp.float32),
                   jax.ShapeDtypeStruct((rows, 1), jnp.float32)),
        grid_spec=pltpu.PrefetchScalarGridSpec(
            num_scalar_prefetch=0,
            grid=(rows // row_tile, n // vocab_tile),
            in_specs=[
                pl.BlockSpec((row_tile, k), lambda i, j: (i, 0)),
                pl.BlockSpec((k, vocab_tile), lambda i, j: (0, j)),
                pl.BlockSpec((1, vocab_tile), lambda i, j: (0, j)),
            ],
            out_specs=[
                pl.BlockSpec((row_tile, vocab_tile), lambda i, j: (i, j)),
                pl.BlockSpec((row_tile, 1), lambda i, j: (i, 0)),
            ],
            scratch_shapes=[
                pltpu.VMEM((row_tile, 1), jnp.float32),   # running max
                pltpu.VMEM((row_tile, 1), jnp.float32),   # running sum-exp
            ],
        ),
        compiler_params=pltpu.CompilerParams(
            dimension_semantics=("parallel", "arbitrary"),
            vmem_limit_bytes=vmem_limit,
        ),
    )(x, w, b)


# ----------------------------------------------------------------------------
# Wrapper
# ----------------------------------------------------------------------------
@functools.partial(jax.jit, static_argnames=("mxu_dtype", "time_tile"))
def lstm_generator_forward(inp, h0, c0, params, *, mxu_dtype=jnp.bfloat16,
                           time_tile=None):
    """
    inp    : (B, T) int32 token ids   (1-D input treated as (B, 1))
    h0, c0 : (1, B, H) float32        (torch init_hidden layout)
    returns pred : (B*T, V) float32 log-probabilities, batch-major rows,
    matching torch's out.contiguous().view(-1, H) -> Linear -> LogSoftmax.
    """
    if inp.ndim == 1:
        inp = inp[:, None]

    emb_table = params["embedding"]          # (V, E)
    wih_t = params["w_ih_t"]                 # (E, 4H)
    whh_t = params["w_hh_t"]                 # (H, 4H)
    b = params["b"]                          # (1, 4H)  (b_ih + b_hh fused)
    wout_t = params["w_out_t"]               # (H, V)
    b_out = params["b_out"]                  # (1, V)

    B, T = inp.shape
    V, E = emb_table.shape
    H = whh_t.shape[0]

    vmem_limit = _vmem_limit_bytes()
    cores = _cores_per_chip()
    if B <= 8:                               # too small to shard across cores
        cores = 1

    Ep = _round_up(E, 128)
    Hp = _round_up(H, 128)
    Bp = _round_up(B, 8 * cores)

    # ---- stage-2 tiling: keep bt maximal (MXU M of the only serial matmul):
    # one tile on 1-TC chips, Bp/2 on v7x; shrink the time tile first when the
    # VMEM budget is exceeded, and only then the batch tile.
    budget = int(vmem_limit * 0.9)
    bt = Bp // cores
    TT = int(time_tile) if time_tile is not None else 16
    TT = max(1, min(TT, T))
    while TT > 1 and _stage2_vmem_bytes(TT, bt, Hp) > budget:
        TT = max(1, TT // 2)
    while bt > 8 and _stage2_vmem_bytes(TT, bt, Hp) > budget:
        nb = bt // 2
        if nb % 8 != 0 or Bp % nb != 0:
            nb = _pick_tile(Bp, nb)
        if nb >= bt:
            break
        bt = nb
    Tp = _round_up(T, TT)

    # ---- pad + cast parameters (per-gate padding keeps [i|f|g|o] layout;
    #      padded columns stay exactly zero so padded h/c lanes remain 0).
    def pad_gate_w(w_t, kp):                 # (K, 4H) -> (Kp, 4*Hp)
        k = w_t.shape[0]
        w4 = w_t.reshape(k, 4, H)
        w4 = jnp.pad(w4, ((0, kp - k), (0, 0), (0, Hp - H)))
        return w4.reshape(kp, 4 * Hp)

    wih_p = pad_gate_w(wih_t, Ep).astype(mxu_dtype)
    whh_p = pad_gate_w(whh_t, Hp).astype(mxu_dtype)
    b_p = jnp.pad(b.reshape(1, 4, H),
                  ((0, 0), (0, 0), (0, Hp - H))).reshape(1, 4 * Hp)

    # output projection: vocab tiled; padded columns masked inside the kernel.
    vt = min(1024, _round_up(V, 128))
    Vp = _round_up(V, vt)
    wout_p = jnp.pad(wout_t, ((0, Hp - H), (0, Vp - V))).astype(mxu_dtype)
    bout_p = jnp.pad(b_out, ((0, 0), (0, Vp - V)))

    # ---- glue: embedding gather, time-major layout, zero padding.
    # TODO(synk): fuse the gather into stage 1 (scalar-prefetched token ids +
    # pl.Element row index_map) when T*B*E gets large.
    emb = jnp.take(emb_table, inp, axis=0)                  # (B, T, E)
    x_tbe = jnp.transpose(emb, (1, 0, 2))                   # (T, B, E)
    x_tbe = jnp.pad(x_tbe, ((0, Tp - T), (0, Bp - B), (0, Ep - E)))
    x2d = x_tbe.reshape(Tp * Bp, Ep).astype(mxu_dtype)

    h0_p = jnp.pad(h0[0].astype(jnp.float32), ((0, Bp - B), (0, Hp - H)))
    c0_p = jnp.pad(c0[0].astype(jnp.float32), ((0, Bp - B), (0, Hp - H)))

    # ---- stage 1: hoisted input projection (parallel GEMM), bf16 gate stream.
    rows1 = Tp * Bp
    rt1 = _pick_tile(rows1, 512)
    if rt1 < 64 and rows1 >= 128:
        rt1 = 256                     # pad rows instead of starving the MXU (M=8)
    rows1_p = _round_up(rows1, rt1)
    if rows1_p > rows1:
        x2d = jnp.pad(x2d, ((0, rows1_p - rows1), (0, 0)))
    gates_pre = _input_projection(x2d, wih_p, b_p, mxu_dtype, rt1, vmem_limit)
    if rows1_p > rows1:
        gates_pre = gates_pre[:rows1]
    gates_pre = gates_pre.reshape(Tp, Bp, 4 * Hp)           # (T, B, 4Hp) bf16

    # ---- stage 2: sequential recurrence (h @ W_hh + gate math only).
    h_seq = pl.pallas_call(
        _lstm_recurrence_kernel,
        out_shape=jax.ShapeDtypeStruct((Tp, Bp, Hp), mxu_dtype),
        grid_spec=pltpu.PrefetchScalarGridSpec(
            num_scalar_prefetch=0,
            grid=(Bp // bt, Tp // TT),
            in_specs=[
                pl.BlockSpec((TT, bt, 4 * Hp), lambda bi, ti: (ti, bi, 0)),
                pl.BlockSpec((bt, Hp), lambda bi, ti: (bi, 0)),
                pl.BlockSpec((bt, Hp), lambda bi, ti: (bi, 0)),
                # grid-invariant recurrent weight: single buffer.
                pl.BlockSpec((Hp, 4 * Hp), lambda bi, ti: (0, 0),
                             pipeline_mode=pl.Buffered(1)),
            ],
            out_specs=pl.BlockSpec((TT, bt, Hp), lambda bi, ti: (ti, bi, 0)),
            scratch_shapes=[
                pltpu.VMEM((bt, Hp), jnp.float32),   # h state (f32)
                pltpu.VMEM((bt, Hp), jnp.float32),   # c state (f32)
            ],
        ),
        compiler_params=pltpu.CompilerParams(
            # batch tiles are independent (shardable across v7x TensorCores);
            # time tiles carry the recurrence and must run in order.
            dimension_semantics=("parallel", "arbitrary"),
            vmem_limit_bytes=vmem_limit,
        ),
    )(gates_pre, h0_p, c0_p, whh_p)

    # ---- stage 3: vocab-tiled output projection + online log-softmax.
    # torch: out.contiguous().view(-1, H) is batch-major -> rows ordered (b, t).
    # The (T,B)->(B,T) reorder is done in XLA on the *small* h tensor so the
    # LM-head GEMM keeps a large M tile (folding it into BlockSpecs caps M at T).
    h_bt = jnp.transpose(h_seq[:T, :B, :], (1, 0, 2)).reshape(B * T, Hp)
    rows3 = B * T
    rt3, rows3_p = _choose_row_tile(rows3, cap=256)
    if rows3_p > rows3:
        h_bt = jnp.pad(h_bt, ((0, rows3_p - rows3), (0, 0)))
    logits, lse = _output_projection_lse(h_bt, wout_p, bout_p, V, rt3, vt,
                                         vmem_limit)
    # Normalize on the valid slice only (padded columns never touched); XLA
    # fuses slice + subtract into one pass.
    # TODO(synk): optionally cast the log-probs to bf16 here to halve the final
    # HBM writeback; kept f32 to match the f32 reference check.
    pred = logits[:rows3, :V] - lse[:rows3]
    return pred


# ----------------------------------------------------------------------------
# Deterministic parameter init (mirrors torch init_params: std = 1/sqrt(shape[0]))
# ----------------------------------------------------------------------------
def init_params(key, vocab_size, embedding_dim, hidden_dim):
    ks = jax.random.split(key, 7)

    def normal(k, shape, std):
        return (std * jax.random.normal(k, shape)).astype(jnp.float32)

    emb = normal(ks[0], (vocab_size, embedding_dim), 1.0 / math.sqrt(vocab_size))
    w_ih = normal(ks[1], (4 * hidden_dim, embedding_dim), 1.0 / math.sqrt(4 * hidden_dim))
    w_hh = normal(ks[2], (4 * hidden_dim, hidden_dim), 1.0 / math.sqrt(4 * hidden_dim))
    b_ih = normal(ks[3], (4 * hidden_dim,), 1.0 / math.sqrt(4 * hidden_dim))
    b_hh = normal(ks[4], (4 * hidden_dim,), 1.0 / math.sqrt(4 * hidden_dim))
    w_out = normal(ks[5], (vocab_size, hidden_dim), 1.0 / math.sqrt(vocab_size))
    b_out = normal(ks[6], (vocab_size,), 1.0 / math.sqrt(vocab_size))

    return {
        "embedding": emb,
        "w_ih_t": jnp.transpose(w_ih),               # (E, 4H)
        "w_hh_t": jnp.transpose(w_hh),               # (H, 4H)
        "b": (b_ih + b_hh).reshape(1, -1),           # (1, 4H)
        "w_out_t": jnp.transpose(w_out),             # (H, V)
        "b_out": b_out.reshape(1, -1),               # (1, V)
    }


# ----------------------------------------------------------------------------
# Pure-JAX reference mirroring the same mixed precision (bf16 MXU operands and
# gate stream, f32 state/accumulation) for a tight correctness check.
# ----------------------------------------------------------------------------
def reference_forward(inp, h0, c0, params, mxu_dtype=jnp.bfloat16):
    if inp.ndim == 1:
        inp = inp[:, None]
    emb = jnp.take(params["embedding"], inp, axis=0)        # (B, T, E)
    B, T, E = emb.shape
    H = params["w_hh_t"].shape[0]

    wih = params["w_ih_t"].astype(mxu_dtype)
    whh = params["w_hh_t"].astype(mxu_dtype)
    wout = params["w_out_t"].astype(mxu_dtype)

    x_tbe = jnp.transpose(emb, (1, 0, 2)).astype(mxu_dtype)  # (T, B, E)
    gates_x = jnp.dot(x_tbe.reshape(T * B, E), wih,
                      preferred_element_type=jnp.float32).reshape(T, B, 4 * H)
    gates_x = (gates_x + params["b"]).astype(mxu_dtype)      # bf16 gate stream

    def step(carry, gx):
        h, c = carry
        g = gx.astype(jnp.float32) + jnp.dot(h.astype(mxu_dtype), whh,
                                             preferred_element_type=jnp.float32)
        i_g = _sigmoid(g[:, 0 * H:1 * H])
        f_g = _sigmoid(g[:, 1 * H:2 * H])
        g_g = jnp.tanh(g[:, 2 * H:3 * H])
        o_g = _sigmoid(g[:, 3 * H:4 * H])
        c_new = f_g * c + i_g * g_g
        h_new = o_g * jnp.tanh(c_new)
        return (h_new, c_new), h_new

    (_, _), hs = jax.lax.scan(step, (h0[0], c0[0]), gates_x)  # (T, B, H) f32
    out = jnp.transpose(hs, (1, 0, 2)).reshape(B * T, H).astype(mxu_dtype)
    logits = jnp.dot(out, wout, preferred_element_type=jnp.float32) + params["b_out"]
    return jax.nn.log_softmax(logits, axis=-1)


if __name__ == "__main__":
    # Small shapes consistent with the module's forward.
    batch_size = 2
    seq_len = 8
    embedding_dim = 32
    hidden_dim = 32
    vocab_size = 128

    key = jax.random.PRNGKey(0)
    k_param, k_inp = jax.random.split(key)
    params = init_params(k_param, vocab_size, embedding_dim, hidden_dim)

    inp = jax.random.randint(k_inp, (batch_size, seq_len), 0, vocab_size,
                             dtype=jnp.int32)
    # init_hidden: zeros of shape (1, B, H)
    h0 = jnp.zeros((1, batch_size, hidden_dim), jnp.float32)
    c0 = jnp.zeros((1, batch_size, hidden_dim), jnp.float32)

    pred = lstm_generator_forward(inp, h0, c0, params)
    pred = jax.block_until_ready(pred)

    ref = reference_forward(inp, h0, c0, params)
    np.testing.assert_allclose(np.asarray(pred), np.asarray(ref),
                               rtol=2e-3, atol=2e-3)
    assert pred.shape == (batch_size * seq_len, vocab_size)

    print("KERNEL_OK")
</pallas_src>

<mosaic_0001>
module attributes {stable_mosaic.version = 11 : i64} {
  func.func @_affine_kernel(%arg0: i32, %arg1: memref<64x128xbf16, #tpu.memory_space<vmem>>, %arg2: memref<128x512xbf16, #tpu.memory_space<vmem>>, %arg3: memref<1x512xf32, #tpu.memory_space<vmem>>, %arg4: memref<64x512xbf16, #tpu.memory_space<vmem>>) attributes {dimension_semantics = [#tpu.dimension_semantics<parallel>], iteration_bounds = array<i64: 1>, scalar_prefetch = 0 : i64, scratch_operands = 0 : i64, tpu.core_type = #tpu.core_type<tc>, window_params = [{transform_indices = @transform_0, window_bounds = array<i64: 64, 128>}, {pipeline_mode = #tpu.pipeline_mode<synchronous>, transform_indices = @transform_1, window_bounds = array<i64: 128, 512>}, {pipeline_mode = #tpu.pipeline_mode<synchronous>, transform_indices = @transform_2, window_bounds = array<i64: 1, 512>}, {transform_indices = @transform_3, window_bounds = array<i64: 64, 512>}]} {
    %c0 = arith.constant 0 : index
    %c0_0 = arith.constant 0 : index
    %0 = vector.load %arg1[%c0, %c0_0] : memref<64x128xbf16, #tpu.memory_space<vmem>>, vector<64x128xbf16>
    %c0_1 = arith.constant 0 : index
    %c0_2 = arith.constant 0 : index
    %1 = vector.load %arg2[%c0_1, %c0_2] : memref<128x512xbf16, #tpu.memory_space<vmem>>, vector<128x512xbf16>
    %cst = arith.constant dense<0.000000e+00> : vector<64x512xf32>
    %2 = tpu.matmul %0, %1, %cst {dimension_numbers = #tpu.dot_dimension_numbers<[1], [0], [0], [1], [0, 0, 1, 1], [], []>} : vector<64x128xbf16>, vector<128x512xbf16>, vector<64x512xf32> -> vector<64x512xf32>
    %c0_3 = arith.constant 0 : index
    %c0_4 = arith.constant 0 : index
    %3 = vector.load %arg3[%c0_3, %c0_4] : memref<1x512xf32, #tpu.memory_space<vmem>>, vector<1x512xf32>
    %4 = vector.broadcast %3 : vector<1x512xf32> to vector<64x512xf32>
    %5 = arith.addf %2, %4 : vector<64x512xf32>
    %6 = arith.truncf %5 : vector<64x512xf32> to vector<64x512xbf16>
    %c0_5 = arith.constant 0 : index
    %c0_6 = arith.constant 0 : index
    %7 = vector.load %arg4[%c0_5, %c0_6] : memref<64x512xbf16, #tpu.memory_space<vmem>>, vector<64x512xbf16>
    tpu.vector_store %arg4[%c0_5, %c0_6], %6 {strides = array<i32>} : memref<64x512xbf16, #tpu.memory_space<vmem>>, vector<64x512xbf16>,
    return
  }
  func.func @transform_0(%arg0: i32) -> (i32, i32) {
    %c0_i32 = arith.constant 0 : i32
    %c0_i32_0 = arith.constant 0 : i32
    return %arg0, %c0_i32 : i32, i32
  }
  func.func @transform_1(%arg0: i32) -> (i32, i32) {
    %c0_i32 = arith.constant 0 : i32
    %c0_i32_0 = arith.constant 0 : i32
    %c0_i32_1 = arith.constant 0 : i32
    return %c0_i32, %c0_i32_0 : i32, i32
  }
  func.func @transform_2(%arg0: i32) -> (i32, i32) {
    %c0_i32 = arith.constant 0 : i32
    %c0_i32_0 = arith.constant 0 : i32
    %c0_i32_1 = arith.constant 0 : i32
    return %c0_i32, %c0_i32_0 : i32, i32
  }
  func.func @transform_3(%arg0: i32) -> (i32, i32) {
    %c0_i32 = arith.constant 0 : i32
    %c0_i32_0 = arith.constant 0 : i32
    return %arg0, %c0_i32 : i32, i32
  }
}

module attributes {stable_mosaic.version = 11 : i64} {
  func.func @_lstm_recurrence_kernel(%arg0: i32, %arg1: i32, %arg2: memref<8x8x512xbf16, #tpu.memory_space<vmem>>, %arg3: memref<8x128xf32, #tpu.memory_space<vmem>>, %arg4: memref<8x128xf32, #tpu.memory_space<vmem>>, %arg5: memref<128x512xbf16, #tpu.memory_space<vmem>>, %arg6: memref<8x8x128xbf16, #tpu.memory_space<vmem>>, %arg7: memref<8x128xf32, #tpu.memory_space<vmem>>, %arg8: memref<8x128xf32, #tpu.memory_space<vmem>>) attributes {dimension_semantics = [#tpu.dimension_semantics<parallel>, #tpu.dimension_semantics<arbitrary>], iteration_bounds = array<i64: 1, 1>, scalar_prefetch = 0 : i64, scratch_operands = 2 : i64, tpu.core_type = #tpu.core_type<tc>, window_params = [{transform_indices = @transform_0, window_bounds = array<i64: 8, 8, 512>}, {transform_indices = @transform_1, window_bounds = array<i64: 8, 128>}, {transform_indices = @transform_2, window_bounds = array<i64: 8, 128>}, {pipeline_mode = #tpu.pipeline_mode<synchronous>, transform_indices = @transform_3, window_bounds = array<i64: 128, 512>}, {transform_indices = @transform_4, window_bounds = array<i64: 8, 8, 128>}]} {
    %c0_i32 = arith.constant 0 : i32
    %0 = arith.cmpi eq, %arg1, %c0_i32 : i32
    %1 = arith.extui %0 : i1 to i32
    %c0_i32_0 = arith.constant 0 : i32
    %2 = arith.cmpi ne, %1, %c0_i32_0 : i32
    scf.if %2 {
      %c0_130 = arith.constant 0 : index
      %c0_131 = arith.constant 0 : index
      %336 = vector.load %arg3[%c0_130, %c0_131] : memref<8x128xf32, #tpu.memory_space<vmem>>, vector<8x128xf32>
      %c0_132 = arith.constant 0 : index
      %c0_133 = arith.constant 0 : index
      %337 = vector.load %arg7[%c0_132, %c0_133] : memref<8x128xf32, #tpu.memory_space<vmem>>, vector<8x128xf32>
      tpu.vector_store %arg7[%c0_132, %c0_133], %336 {strides = array<i32>} : memref<8x128xf32, #tpu.memory_space<vmem>>, vector<8x128xf32>,
      %c0_134 = arith.constant 0 : index
      %c0_135 = arith.constant 0 : index
      %338 = vector.load %arg4[%c0_134, %c0_135] : memref<8x128xf32, #tpu.memory_space<vmem>>, vector<8x128xf32>
      %c0_136 = arith.constant 0 : index
      %c0_137 = arith.constant 0 : index
      %339 = vector.load %arg8[%c0_136, %c0_137] : memref<8x128xf32, #tpu.memory_space<vmem>>, vector<8x128xf32>
      tpu.vector_store %arg8[%c0_136, %c0_137], %338 {strides = array<i32>} : memref<8x128xf32, #tpu.memory_space<vmem>>, vector<8x128xf32>,
    } else {
    }
    %c0 = arith.constant 0 : index
    %c0_1 = arith.constant 0 : index
    %3 = vector.load %arg5[%c0, %c0_1] : memref<128x512xbf16, #tpu.memory_space<vmem>>, vector<128x512xbf16>
    %c0_2 = arith.constant 0 : index
    %c0_3 = arith.constant 0 : index
    %4 = vector.load %arg7[%c0_2, %c0_3] : memref<8x128xf32, #tpu.memory_space<vmem>>, vector<8x128xf32>
    %c0_4 = arith.constant 0 : index
    %c0_5 = arith.constant 0 : index
    %5 = vector.load %arg8[%c0_4, %c0_5] : memref<8x128xf32, #tpu.memory_space<vmem>>, vector<8x128xf32>
    %c0_6 = arith.constant 0 : index
    %c0_7 = arith.constant 0 : index
    %c0_8 = arith.constant 0 : index
    %6 = vector.load %arg2[%c0_6, %c0_7, %c0_8] : memref<8x8x512xbf16, #tpu.memory_space<vmem>>, vector<1x8x512xbf16>
    %7 = vector.shape_cast %6 : vector<1x8x512xbf16> to vector<8x512xbf16>
    %8 = arith.extf %7 : vector<8x512xbf16> to vector<8x512xf32>
    %9 = arith.truncf %4 : vector<8x128xf32> to vector<8x128xbf16>
    %cst = arith.constant dense<0.000000e+00> : vector<8x512xf32>
    %10 = tpu.matmul %9, %3, %cst {dimension_numbers = #tpu.dot_dimension_numbers<[1], [0], [0], [1], [0, 0, 1, 1], [], []>} : vector<8x128xbf16>, vector<128x512xbf16>, vector<8x512xf32> -> vector<8x512xf32>
    %11 = arith.addf %8, %10 : vector<8x512xf32>
    %12 = vector.extract_strided_slice %11 {offsets = [0, 0], sizes = [8, 128], strides = [1, 1]} : vector<8x512xf32> to vector<8x128xf32>
    %cst_9 = arith.constant 5.000000e-01 : f32
    %13 = vector.broadcast %cst_9 : f32 to vector<8x128xf32>
    %14 = arith.mulf %13, %12 : vector<8x128xf32>
    %15 = math.tanh %14 : vector<8x128xf32>
    %cst_10 = arith.constant 1.000000e+00 : f32
    %16 = vector.broadcast %cst_10 : f32 to vector<8x128xf32>
    %17 = arith.addf %15, %16 : vector<8x128xf32>
    %cst_11 = arith.constant 5.000000e-01 : f32
    %18 = vector.broadcast %cst_11 : f32 to vector<8x128xf32>
    %19 = arith.mulf %18, %17 : vector<8x128xf32>
    %20 = vector.extract_strided_slice %11 {offsets = [0, 128], sizes = [8, 128], strides = [1, 1]} : vector<8x512xf32> to vector<8x128xf32>
    %cst_12 = arith.constant 5.000000e-01 : f32
    %21 = vector.broadcast %cst_12 : f32 to vector<8x128xf32>
    %22 = arith.mulf %21, %20 : vector<8x128xf32>
    %23 = math.tanh %22 : vector<8x128xf32>
    %cst_13 = arith.constant 1.000000e+00 : f32
    %24 = vector.broadcast %cst_13 : f32 to vector<8x128xf32>
    %25 = arith.addf %23, %24 : vector<8x128xf32>
    %cst_14 = arith.constant 5.000000e-01 : f32
    %26 = vector.broadcast %cst_14 : f32 to vector<8x128xf32>
    %27 = arith.mulf %26, %25 : vector<8x128xf32>
    %28 = vector.extract_strided_slice %11 {offsets = [0, 256], sizes = [8, 128], strides = [1, 1]} : vector<8x512xf32> to vector<8x128xf32>
    %29 = math.tanh %28 : vector<8x128xf32>
    %30 = vector.extract_strided_slice %11 {offsets = [0, 384], sizes = [8, 128], strides = [1, 1]} : vector<8x512xf32> to vector<8x128xf32>
    %cst_15 = arith.constant 5.000000e-01 : f32
    %31 = vector.broadcast %cst_15 : f32 to vector<8x128xf32>
    %32 = arith.mulf %31, %30 : vector<8x128xf32>
    %33 = math.tanh %32 : vector<8x128xf32>
    %cst_16 = arith.constant 1.000000e+00 : f32
    %34 = vector.broadcast %cst_16 : f32 to vector<8x128xf32>
    %35 = arith.addf %33, %34 : vector<8x128xf32>
    %cst_17 = arith.constant 5.000000e-01 : f32
    %36 = vector.broadcast %cst_17 : f32 to vector<8x128xf32>
    %37 = arith.mulf %36, %35 : vector<8x128xf32>
    %38 = arith.mulf %27, %5 : vector<8x128xf32>
    %39 = arith.mulf %19, %29 : vector<8x128xf32>
    %40 = arith.addf %38, %39 : vector<8x128xf32>
    %41 = math.tanh %40 : vector<8x128xf32>
    %42 = arith.mulf %37, %41 : vector<8x128xf32>
    %43 = arith.truncf %42 : vector<8x128xf32> to vector<8x128xbf16>
    %c0_18 = arith.constant 0 : index
    %c0_19 = arith.constant 0 : index
    %c0_20 = arith.constant 0 : index
    %44 = vector.load %arg6[%c0_18, %c0_19, %c0_20] : memref<8x8x128xbf16, #tpu.memory_space<vmem>>, vector<1x8x128xbf16>
    %45 = vector.shape_cast %44 : vector<1x8x128xbf16> to vector<8x128xbf16>
    %46 = vector.shape_cast %43 : vector<8x128xbf16> to vector<1x8x128xbf16>
    tpu.vector_store %arg6[%c0_18, %c0_19, %c0_20], %46 {strides = array<i32>} : memref<8x8x128xbf16, #tpu.memory_space<vmem>>, vector<1x8x128xbf16>,
    %c1 = arith.constant 1 : index
    %c0_21 = arith.constant 0 : index
    %c0_22 = arith.constant 0 : index
    %47 = vector.load %arg2[%c1, %c0_21, %c0_22] : memref<8x8x512xbf16, #tpu.memory_space<vmem>>, vector<1x8x512xbf16>
    %48 = vector.shape_cast %47 : vector<1x8x512xbf16> to vector<8x512xbf16>
    %49 = arith.extf %48 : vector<8x512xbf16> to vector<8x512xf32>
    %50 = arith.truncf %42 : vector<8x128xf32> to vector<8x128xbf16>
    %cst_23 = arith.constant dense<0.000000e+00> : vector<8x512xf32>
    %51 = tpu.matmul %50, %3, %cst_23 {dimension_numbers = #tpu.dot_dimension_numbers<[1], [0], [0], [1], [0, 0, 1, 1], [], []>} : vector<8x128xbf16>, vector<128x512xbf16>, vector<8x512xf32> -> vector<8x512xf32>
    %52 = arith.addf %49, %51 : vector<8x512xf32>
    %53 = vector.extract_strided_slice %52 {offsets = [0, 0], sizes = [8, 128], strides = [1, 1]} : vector<8x512xf32> to vector<8x128xf32>
    %cst_24 = arith.constant 5.000000e-01 : f32
    %54 = vector.broadcast %cst_24 : f32 to vector<8x128xf32>
    %55 = arith.mulf %54, %53 : vector<8x128xf32>
    %56 = math.tanh %55 : vector<8x128xf32>
    %cst_25 = arith.constant 1.000000e+00 : f32
    %57 = vector.broadcast %cst_25 : f32 to vector<8x128xf32>
    %58 = arith.addf %56, %57 : vector<8x128xf32>
    %cst_26 = arith.constant 5.000000e-01 : f32
    %59 = vector.broadcast %cst_26 : f32 to vector<8x128xf32>
    %60 = arith.mulf %59, %58 : vector<8x128xf32>
    %61 = vector.extract_strided_slice %52 {offsets = [0, 128], sizes = [8, 128], strides = [1, 1]} : vector<8x512xf32> to vector<8x128xf32>
    %cst_27 = arith.constant 5.000000e-01 : f32
    %62 = vector.broadcast %cst_27 : f32 to vector<8x128xf32>
    %63 = arith.mulf %62, %61 : vector<8x128xf32>
    %64 = math.tanh %63 : vector<8x128xf32>
    %cst_28 = arith.constant 1.000000e+00 : f32
    %65 = vector.broadcast %cst_28 : f32 to vector<8x128xf32>
    %66 = arith.addf %64, %65 : vector<8x128xf32>
    %cst_29 = arith.constant 5.000000e-01 : f32
    %67 = vector.broadcast %cst_29 : f32 to vector<8x128xf32>
    %68 = arith.mulf %67, %66 : vector<8x128xf32>
    %69 = vector.extract_strided_slice %52 {offsets = [0, 256], sizes = [8, 128], strides = [1, 1]} : vector<8x512xf32> to vector<8x128xf32>
    %70 = math.tanh %69 : vector<8x128xf32>
    %71 = vector.extract_strided_slice %52 {offsets = [0, 384], sizes = [8, 128], strides = [1, 1]} : vector<8x512xf32> to vector<8x128xf32>
    %cst_30 = arith.constant 5.000000e-01 : f32
    %72 = vector.broadcast %cst_30 : f32 to vector<8x128xf32>
    %73 = arith.mulf %72, %71 : vector<8x128xf32>
    %74 = math.tanh %73 : vector<8x128xf32>
    %cst_31 = arith.constant 1.000000e+00 : f32
    %75 = vector.broadcast %cst_31 : f32 to vector<8x128xf32>
    %76 = arith.addf %74, %75 : vector<8x128xf32>
    %cst_32 = arith.constant 5.000000e-01 : f32
    %77 = vector.broadcast %cst_32 : f32 to vector<8x128xf32>
    %78 = arith.mulf %77, %76 : vector<8x128xf32>
    %79 = arith.mulf %68, %40 : vector<8x128xf32>
    %80 = arith.mulf %60, %70 : vector<8x128xf32>
    %81 = arith.addf %79, %80 : vector<8x128xf32>
    %82 = math.tanh %81 : vector<8x128xf32>
    %83 = arith.mulf %78, %82 : vector<8x128xf32>
    %84 = arith.truncf %83 : vector<8x128xf32> to vector<8x128xbf16>
    %c1_33 = arith.constant 1 : index
    %c0_34 = arith.constant 0 : index
    %c0_35 = arith.constant 0 : index
    %85 = vector.load %arg6[%c1_33, %c0_34, %c0_35] : memref<8x8x128xbf16, #tpu.memory_space<vmem>>, vector<1x8x128xbf16>
    %86 = vector.shape_cast %85 : vector<1x8x128xbf16> to vector<8x128xbf16>
    %87 = vector.shape_cast %84 : vector<8x128xbf16> to vector<1x8x128xbf16>
    tpu.vector_store %arg6[%c1_33, %c0_34, %c0_35], %87 {strides = array<i32>} : memref<8x8x128xbf16, #tpu.memory_space<vmem>>, vector<1x8x128xbf16>,
    %c2 = arith.constant 2 : index
    %c0_36 = arith.constant 0 : index
    %c0_37 = arith.constant 0 : index
    %88 = vector.load %arg2[%c2, %c0_36, %c0_37] : memref<8x8x512xbf16, #tpu.memory_space<vmem>>, vector<1x8x512xbf16>
    %89 = vector.shape_cast %88 : vector<1x8x512xbf16> to vector<8x512xbf16>
    %90 = arith.extf %89 : vector<8x512xbf16> to vector<8x512xf32>
    %91 = arith.truncf %83 : vector<8x128xf32> to vector<8x128xbf16>
    %cst_38 = arith.constant dense<0.000000e+00> : vector<8x512xf32>
    %92 = tpu.matmul %91, %3, %cst_38 {dimension_numbers = #tpu.dot_dimension_numbers<[1], [0], [0], [1], [0, 0, 1, 1], [], []>} : vector<8x128xbf16>, vector<128x512xbf16>, vector<8x512xf32> -> vector<8x512xf32>
    %93 = arith.addf %90, %92 : vector<8x512xf32>
    %94 = vector.extract_strided_slice %93 {offsets = [0, 0], sizes = [8, 128], strides = [1, 1]} : vector<8x512xf32> to vector<8x128xf32>
    %cst_39 = arith.constant 5.000000e-01 : f32
    %95 = vector.broadcast %cst_39 : f32 to vector<8x128xf32>
    %96 = arith.mulf %95, %94 : vector<8x128xf32>
    %97 = math.tanh %96 : vector<8x128xf32>
    %cst_40 = arith.constant 1.000000e+00 : f32
    %98 = vector.broadcast %cst_40 : f32 to vector<8x128xf32>
    %99 = arith.addf %97, %98 : vector<8x128xf32>
    %cst_41 = arith.constant 5.000000e-01 : f32
    %100 = vector.broadcast %cst_41 : f32 to vector<8x128xf32>
    %101 = arith.mulf %100, %99 : vector<8x128xf32>
    %102 = vector.extract_strided_slice %93 {offsets = [0, 128], sizes = [8, 128], strides = [1, 1]} : vector<8x512xf32> to vector<8x128xf32>
    %cst_42 = arith.constant 5.000000e-01 : f32
    %103 = vector.broadcast %cst_42 : f32 to vector<8x128xf32>
    %104 = arith.mulf %103, %102 : vector<8x128xf32>
    %105 = math.tanh %104 : vector<8x128xf32>
    %cst_43 = arith.constant 1.000000e+00 : f32
    %106 = vector.broadcast %cst_43 : f32 to vector<8x128xf32>
    %107 = arith.addf %105, %106 : vector<8x128xf32>
    %cst_44 = arith.constant 5.000000e-01 : f32
    %108 = vector.broadcast %cst_44 : f32 to vector<8x128xf32>
    %109 = arith.mulf %108, %107 : vector<8x128xf32>
    %110 = vector.extract_strided_slice %93 {offsets = [0, 256], sizes = [8, 128], strides = [1, 1]} : vector<8x512xf32> to vector<8x128xf32>
    %111 = math.tanh %110 : vector<8x128xf32>
    %112 = vector.extract_strided_slice %93 {offsets = [0, 384], sizes = [8, 128], strides = [1, 1]} : vector<8x512xf32> to vector<8x128xf32>
    %cst_45 = arith.constant 5.000000e-01 : f32
    %113 = vector.broadcast %cst_45 : f32 to vector<8x128xf32>
    %114 = arith.mulf %113, %112 : vector<8x128xf32>
    %115 = math.tanh %114 : vector<8x128xf32>
    %cst_46 = arith.constant 1.000000e+00 : f32
    %116 = vector.broadcast %cst_46 : f32 to vector<8x128xf32>
    %117 = arith.addf %115, %116 : vector<8x128xf32>
    %cst_47 = arith.constant 5.000000e-01 : f32
    %118 = vector.broadcast %cst_47 : f32 to vector<8x128xf32>
    %119 = arith.mulf %118, %117 : vector<8x128xf32>
    %120 = arith.mulf %109, %81 : vector<8x128xf32>
    %121 = arith.mulf %101, %111 : vector<8x128xf32>
    %122 = arith.addf %120, %121 : vector<8x128xf32>
    %123 = math.tanh %122 : vector<8x128xf32>
    %124 = arith.mulf %119, %123 : vector<8x128xf32>
    %125 = arith.truncf %124 : vector<8x128xf32> to vector<8x128xbf16>
    %c2_48 = arith.constant 2 : index
    %c0_49 = arith.constant 0 : index
    %c0_50 = arith.constant 0 : index
    %126 = vector.load %arg6[%c2_48, %c0_49, %c0_50] : memref<8x8x128xbf16, #tpu.memory_space<vmem>>, vector<1x8x128xbf16>
    %127 = vector.shape_cast %126 : vector<1x8x128xbf16> to vector<8x128xbf16>
    %128 = vector.shape_cast %125 : vector<8x128xbf16> to vector<1x8x128xbf16>
    tpu.vector_store %arg6[%c2_48, %c0_49, %c0_50], %128 {strides = array<i32>} : memref<8x8x128xbf16, #tpu.memory_space<vmem>>, vector<1x8x128xbf16>,
    %c3 = arith.constant 3 : index
    %c0_51 = arith.constant 0 : index
    %c0_52 = arith.constant 0 : index
    %129 = vector.load %arg2[%c3, %c0_51, %c0_52] : memref<8x8x512xbf16, #tpu.memory_space<vmem>>, vector<1x8x512xbf16>
    %130 = vector.shape_cast %129 : vector<1x8x512xbf16> to vector<8x512xbf16>
    %131 = arith.extf %130 : vector<8x512xbf16> to vector<8x512xf32>
    %132 = arith.truncf %124 : vector<8x128xf32> to vector<8x128xbf16>
    %cst_53 = arith.constant dense<0.000000e+00> : vector<8x512xf32>
    %133 = tpu.matmul %132, %3, %cst_53 {dimension_numbers = #tpu.dot_dimension_numbers<[1], [0], [0], [1], [0, 0, 1, 1], [], []>} : vector<8x128xbf16>, vector<128x512xbf16>, vector<8x512xf32> -> vector<8x512xf32>
    %134 = arith.addf %131, %133 : vector<8x512xf32>
    %135 = vector.extract_strided_slice %134 {offsets = [0, 0], sizes = [8, 128], strides = [1, 1]} : vector<8x512xf32> to vector<8x128xf32>
    %cst_54 = arith.constant 5.000000e-01 : f32
    %136 = vector.broadcast %cst_54 : f32 to vector<8x128xf32>
    %137 = arith.mulf %136, %135 : vector<8x128xf32>
    %138 = math.tanh %137 : vector<8x128xf32>
    %cst_55 = arith.constant 1.000000e+00 : f32
    %139 = vector.broadcast %cst_55 : f32 to vector<8x128xf32>
    %140 = arith.addf %138, %139 : vector<8x128xf32>
    %cst_56 = arith.constant 5.000000e-01 : f32
    %141 = vector.broadcast %cst_56 : f32 to vector<8x128xf32>
    %142 = arith.mulf %141, %140 : vector<8x128xf32>
    %143 = vector.extract_strided_slice %134 {offsets = [0, 128], sizes = [8, 128], strides = [1, 1]} : vector<8x512xf32> to vector<8x128xf32>
    %cst_57 = arith.constant 5.000000e-01 : f32
    %144 = vector.broadcast %cst_57 : f32 to vector<8x128xf32>
    %145 = arith.mulf %144, %143 : vector<8x128xf32>
    %146 = math.tanh %145 : vector<8x128xf32>
    %cst_58 = arith.constant 1.000000e+00 : f32
    %147 = vector.broadcast %cst_58 : f32 to vector<8x128xf32>
    %148 = arith.addf %146, %147 : vector<8x128xf32>
    %cst_59 = arith.constant 5.000000e-01 : f32
    %149 = vector.broadcast %cst_59 : f32 to vector<8x128xf32>
    %150 = arith.mulf %149, %148 : vector<8x128xf32>
    %151 = vector.extract_strided_slice %134 {offsets = [0, 256], sizes = [8, 128], strides = [1, 1]} : vector<8x512xf32> to vector<8x128xf32>
    %152 = math.tanh %151 : vector<8x128xf32>
    %153 = vector.extract_strided_slice %134 {offsets = [0, 384], sizes = [8, 128], strides = [1, 1]} : vector<8x512xf32> to vector<8x128xf32>
    %cst_60 = arith.constant 5.000000e-01 : f32
    %154 = vector.broadcast %cst_60 : f32 to vector<8x128xf32>
    %155 = arith.mulf %154, %153 : vector<8x128xf32>
    %156 = math.tanh %155 : vector<8x128xf32>
    %cst_61 = arith.constant 1.000000e+00 : f32
    %157 = vector.broadcast %cst_61 : f32 to vector<8x128xf32>
    %158 = arith.addf %156, %157 : vector<8x128xf32>
    %cst_62 = arith.constant 5.000000e-01 : f32
    %159 = vector.broadcast %cst_62 : f32 to vector<8x128xf32>
    %160 = arith.mulf %159, %158 : vector<8x128xf32>
    %161 = arith.mulf %150, %122 : vector<8x128xf32>
    %162 = arith.mulf %142, %152 : vector<8x128xf32>
    %163 = arith.addf %161, %162 : vector<8x128xf32>
    %164 = math.tanh %163 : vector<8x128xf32>
    %165 = arith.mulf %160, %164 : vector<8x128xf32>
    %166 = arith.truncf %165 : vector<8x128xf32> to vector<8x128xbf16>
    %c3_63 = arith.constant 3 : index
    %c0_64 = arith.constant 0 : index
    %c0_65 = arith.constant 0 : index
    %167 = vector.load %arg6[%c3_63, %c0_64, %c0_65] : memref<8x8x128xbf16, #tpu.memory_space<vmem>>, vector<1x8x128xbf16>
    %168 = vector.shape_cast %167 : vector<1x8x128xbf16> to vector<8x128xbf16>
    %169 = vector.shape_cast %166 : vector<8x128xbf16> to vector<1x8x128xbf16>
    tpu.vector_store %arg6[%c3_63, %c0_64, %c0_65], %169 {strides = array<i32>} : memref<8x8x128xbf16, #tpu.memory_space<vmem>>, vector<1x8x128xbf16>,
    %c4 = arith.constant 4 : index
    %c0_66 = arith.constant 0 : index
    %c0_67 = arith.constant 0 : index
    %170 = vector.load %arg2[%c4, %c0_66, %c0_67] : memref<8x8x512xbf16, #tpu.memory_space<vmem>>, vector<1x8x512xbf16>
    %171 = vector.shape_cast %170 : vector<1x8x512xbf16> to vector<8x512xbf16>
    %172 = arith.extf %171 : vector<8x512xbf16> to vector<8x512xf32>
    %173 = arith.truncf %165 : vector<8x128xf32> to vector<8x128xbf16>
    %cst_68 = arith.constant dense<0.000000e+00> : vector<8x512xf32>
    %174 = tpu.matmul %173, %3, %cst_68 {dimension_numbers = #tpu.dot_dimension_numbers<[1], [0], [0], [1], [0, 0, 1, 1], [], []>} : vector<8x128xbf16>, vector<128x512xbf16>, vector<8x512xf32> -> vector<8x512xf32>
    %175 = arith.addf %172, %174 : vector<8x512xf32>
    %176 = vector.extract_strided_slice %175 {offsets = [0, 0], sizes = [8, 128], strides = [1, 1]} : vector<8x512xf32> to vector<8x128xf32>
    %cst_69 = arith.constant 5.000000e-01 : f32
    %177 = vector.broadcast %cst_69 : f32 to vector<8x128xf32>
    %178 = arith.mulf %177, %176 : vector<8x128xf32>
    %179 = math.tanh %178 : vector<8x128xf32>
    %cst_70 = arith.constant 1.000000e+00 : f32
    %180 = vector.broadcast %cst_70 : f32 to vector<8x128xf32>
    %181 = arith.addf %179, %180 : vector<8x128xf32>
    %cst_71 = arith.constant 5.000000e-01 : f32
    %182 = vector.broadcast %cst_71 : f32 to vector<8x128xf32>
    %183 = arith.mulf %182, %181 : vector<8x128xf32>
    %184 = vector.extract_strided_slice %175 {offsets = [0, 128], sizes = [8, 128], strides = [1, 1]} : vector<8x512xf32> to vector<8x128xf32>
    %cst_72 = arith.constant 5.000000e-01 : f32
    %185 = vector.broadcast %cst_72 : f32 to vector<8x128xf32>
    %186 = arith.mulf %185, %184 : vector<8x128xf32>
    %187 = math.tanh %186 : vector<8x128xf32>
    %cst_73 = arith.constant 1.000000e+00 : f32
    %188 = vector.broadcast %cst_73 : f32 to vector<8x128xf32>
    %189 = arith.addf %187, %188 : vector<8x128xf32>
    %cst_74 = arith.constant 5.000000e-01 : f32
    %190 = vector.broadcast %cst_74 : f32 to vector<8x128xf32>
    %191 = arith.mulf %190, %189 : vector<8x128xf32>
    %192 = vector.extract_strided_slice %175 {offsets = [0, 256], sizes = [8, 128], strides = [1, 1]} : vector<8x512xf32> to vector<8x128xf32>
    %193 = math.tanh %192 : vector<8x128xf32>
    %194 = vector.extract_strided_slice %175 {offsets = [0, 384], sizes = [8, 128], strides = [1, 1]} : vector<8x512xf32> to vector<8x128xf32>
    %cst_75 = arith.constant 5.000000e-01 : f32
    %195 = vector.broadcast %cst_75 : f32 to vector<8x128xf32>
    %196 = arith.mulf %195, %194 : vector<8x128xf32>
    %197 = math.tanh %196 : vector<8x128xf32>
    %cst_76 = arith.constant 1.000000e+00 : f32
    %198 = vector.broadcast %cst_76 : f32 to vector<8x128xf32>
    %199 = arith.addf %197, %198 : vector<8x128xf32>
    %cst_77 = arith.constant 5.000000e-01 : f32
    %200 = vector.broadcast %cst_77 : f32 to vector<8x128xf32>
    %201 = arith.mulf %200, %199 : vector<8x128xf32>
    %202 = arith.mulf %191, %163 : vector<8x128xf32>
    %203 = arith.mulf %183, %193 : vector<8x128xf32>
    %204 = arith.addf %202, %203 : vector<8x128xf32>
    %205 = math.tanh %204 : vector<8x128xf32>
    %206 = arith.mulf %201, %205 : vector<8x128xf32>
    %207 = arith.truncf %206 : vector<8x128xf32> to vector<8x128xbf16>
    %c4_78 = arith.constant 4 : index
    %c0_79 = arith.constant 0 : index
    %c0_80 = arith.constant 0 : index
    %208 = vector.load %arg6[%c4_78, %c0_79, %c0_80] : memref<8x8x128xbf16, #tpu.memory_space<vmem>>, vector<1x8x128xbf16>
    %209 = vector.shape_cast %208 : vector<1x8x128xbf16> to vector<8x128xbf16>
    %210 = vector.shape_cast %207 : vector<8x128xbf16> to vector<1x8x128xbf16>
    tpu.vector_store %arg6[%c4_78, %c0_79, %c0_80], %210 {strides = array<i32>} : memref<8x8x128xbf16, #tpu.memory_space<vmem>>, vector<1x8x128xbf16>,
    %c5 = arith.constant 5 : index
    %c0_81 = arith.constant 0 : index
    %c0_82 = arith.constant 0 : index
    %211 = vector.load %arg2[%c5, %c0_81, %c0_82] : memref<8x8x512xbf16, #tpu.memory_space<vmem>>, vector<1x8x512xbf16>
    %212 = vector.shape_cast %211 : vector<1x8x512xbf16> to vector<8x512xbf16>
    %213 = arith.extf %212 : vector<8x512xbf16> to vector<8x512xf32>
    %214 = arith.truncf %206 : vector<8x128xf32> to vector<8x128xbf16>
    %cst_83 = arith.constant dense<0.000000e+00> : vector<8x512xf32>
    %215 = tpu.matmul %214, %3, %cst_83 {dimension_numbers = #tpu.dot_dimension_numbers<[1], [0], [0], [1], [0, 0, 1, 1], [], []>} : vector<8x128xbf16>, vector<128x512xbf16>, vector<8x512xf32> -> vector<8x512xf32>
    %216 = arith.addf %213, %215 : vector<8x512xf32>
    %217 = vector.extract_strided_slice %216 {offsets = [0, 0], sizes = [8, 128], strides = [1, 1]} : vector<8x512xf32> to vector<8x128xf32>
    %cst_84 = arith.constant 5.000000e-01 : f32
    %218 = vector.broadcast %cst_84 : f32 to vector<8x128xf32>
    %219 = arith.mulf %218, %217 : vector<8x128xf32>
    %220 = math.tanh %219 : vector<8x128xf32>
    %cst_85 = arith.constant 1.000000e+00 : f32
    %221 = vector.broadcast %cst_85 : f32 to vector<8x128xf32>
    %222 = arith.addf %220, %221 : vector<8x128xf32>
    %cst_86 = arith.constant 5.000000e-01 : f32
    %223 = vector.broadcast %cst_86 : f32 to vector<8x128xf32>
    %224 = arith.mulf %223, %222 : vector<8x128xf32>
    %225 = vector.extract_strided_slice %216 {offsets = [0, 128], sizes = [8, 128], strides = [1, 1]} : vector<8x512xf32> to vector<8x128xf32>
    %cst_87 = arith.constant 5.000000e-01 : f32
    %226 = vector.broadcast %cst_87 : f32 to vector<8x128xf32>
    %227 = arith.mulf %226, %225 : vector<8x128xf32>
    %228 = math.tanh %227 : vector<8x128xf32>
    %cst_88 = arith.constant 1.000000e+00 : f32
    %229 = vector.broadcast %cst_88 : f32 to vector<8x128xf32>
    %230 = arith.addf %228, %229 : vector<8x128xf32>
    %cst_89 = arith.constant 5.000000e-01 : f32
    %231 = vector.broadcast %cst_89 : f32 to vector<8x128xf32>
    %232 = arith.mulf %231, %230 : vector<8x128xf32>
    %233 = vector.extract_strided_slice %216 {offsets = [0, 256], sizes = [8, 128], strides = [1, 1]} : vector<8x512xf32> to vector<8x128xf32>
    %234 = math.tanh %233 : vector<8x128xf32>
    %235 = vector.extract_strided_slice %216 {offsets = [0, 384], sizes = [8, 128], strides = [1, 1]} : vector<8x512xf32> to vector<8x128xf32>
    %cst_90 = arith.constant 5.000000e-01 : f32
    %236 = vector.broadcast %cst_90 : f32 to vector<8x128xf32>
    %237 = arith.mulf %236, %235 : vector<8x128xf32>
    %238 = math.tanh %237 : vector<8x128xf32>
    %cst_91 = arith.constant 1.000000e+00 : f32
    %239 = vector.broadcast %cst_91 : f32 to vector<8x128xf32>
    %240 = arith.addf %238, %239 : vector<8x128xf32>
    %cst_92 = arith.constant 5.000000e-01 : f32
    %241 = vector.broadcast %cst_92 : f32 to vector<8x128xf32>
    %242 = arith.mulf %241, %240 : vector<8x128xf32>
    %243 = arith.mulf %232, %204 : vector<8x128xf32>
    %244 = arith.mulf %224, %234 : vector<8x128xf32>
    %245 = arith.addf %243, %244 : vector<8x128xf32>
    %246 = math.tanh %245 : vector<8x128xf32>
    %247 = arith.mulf %242, %246 : vector<8x128xf32>
    %248 = arith.truncf %247 : vector<8x128xf32> to vector<8x128xbf16>
    %c5_93 = arith.constant 5 : index
    %c0_94 = arith.constant 0 : index
    %c0_95 = arith.constant 0 : index
    %249 = vector.load %arg6[%c5_93, %c0_94, %c0_95] : memref<8x8x128xbf16, #tpu.memory_space<vmem>>, vector<1x8x128xbf16>
    %250 = vector.shape_cast %249 : vector<1x8x128xbf16> to vector<8x128xbf16>
    %251 = vector.shape_cast %248 : vector<8x128xbf16> to vector<1x8x128xbf16>
    tpu.vector_store %arg6[%c5_93, %c0_94, %c0_95], %251 {strides = array<i32>} : memref<8x8x128xbf16, #tpu.memory_space<vmem>>, vector<1x8x128xbf16>,
    %c6 = arith.constant 6 : index
    %c0_96 = arith.constant 0 : index
    %c0_97 = arith.constant 0 : index
    %252 = vector.load %arg2[%c6, %c0_96, %c0_97] : memref<8x8x512xbf16, #tpu.memory_space<vmem>>, vector<1x8x512xbf16>
    %253 = vector.shape_cast %252 : vector<1x8x512xbf16> to vector<8x512xbf16>
    %254 = arith.extf %253 : vector<8x512xbf16> to vector<8x512xf32>
    %255 = arith.truncf %247 : vector<8x128xf32> to vector<8x128xbf16>
    %cst_98 = arith.constant dense<0.000000e+00> : vector<8x512xf32>
    %256 = tpu.matmul %255, %3, %cst_98 {dimension_numbers = #tpu.dot_dimension_numbers<[1], [0], [0], [1], [0, 0, 1, 1], [], []>} : vector<8x128xbf16>, vector<128x512xbf16>, vector<8x512xf32> -> vector<8x512xf32>
    %257 = arith.addf %254, %256 : vector<8x512xf32>
    %258 = vector.extract_strided_slice %257 {offsets = [0, 0], sizes = [8, 128], strides = [1, 1]} : vector<8x512xf32> to vector<8x128xf32>
    %cst_99 = arith.constant 5.000000e-01 : f32
    %259 = vector.broadcast %cst_99 : f32 to vector<8x128xf32>
    %260 = arith.mulf %259, %258 : vector<8x128xf32>
    %261 = math.tanh %260 : vector<8x128xf32>
    %cst_100 = arith.constant 1.000000e+00 : f32
    %262 = vector.broadcast %cst_100 : f32 to vector<8x128xf32>
    %263 = arith.addf %261, %262 : vector<8x128xf32>
    %cst_101 = arith.constant 5.000000e-01 : f32
    %264 = vector.broadcast %cst_101 : f32 to vector<8x128xf32>
    %265 = arith.mulf %264, %263 : vector<8x128xf32>
    %266 = vector.extract_strided_slice %257 {offsets = [0, 128], sizes = [8, 128], strides = [1, 1]} : vector<8x512xf32> to vector<8x128xf32>
    %cst_102 = arith.constant 5.000000e-01 : f32
    %267 = vector.broadcast %cst_102 : f32 to vector<8x128xf32>
    %268 = arith.mulf %267, %266 : vector<8x128xf32>
    %269 = math.tanh %268 : vector<8x128xf32>
    %cst_103 = arith.constant 1.000000e+00 : f32
    %270 = vector.broadcast %cst_103 : f32 to vector<8x128xf32>
    %271 = arith.addf %269, %270 : vector<8x128xf32>
    %cst_104 = arith.constant 5.000000e-01 : f32
    %272 = vector.broadcast %cst_104 : f32 to vector<8x128xf32>
    %273 = arith.mulf %272, %271 : vector<8x128xf32>
    %274 = vector.extract_strided_slice %257 {offsets = [0, 256], sizes = [8, 128], strides = [1, 1]} : vector<8x512xf32> to vector<8x128xf32>
    %275 = math.tanh %274 : vector<8x128xf32>
    %276 = vector.extract_strided_slice %257 {offsets = [0, 384], sizes = [8, 128], strides = [1, 1]} : vector<8x512xf32> to vector<8x128xf32>
    %cst_105 = arith.constant 5.000000e-01 : f32
    %277 = vector.broadcast %cst_105 : f32 to vector<8x128xf32>
    %278 = arith.mulf %277, %276 : vector<8x128xf32>
    %279 = math.tanh %278 : vector<8x128xf32>
    %cst_106 = arith.constant 1.000000e+00 : f32
    %280 = vector.broadcast %cst_106 : f32 to vector<8x128xf32>
    %281 = arith.addf %279, %280 : vector<8x128xf32>
    %cst_107 = arith.constant 5.000000e-01 : f32
    %282 = vector.broadcast %cst_107 : f32 to vector<8x128xf32>
    %283 = arith.mulf %282, %281 : vector<8x128xf32>
    %284 = arith.mulf %273, %245 : vector<8x128xf32>
    %285 = arith.mulf %265, %275 : vector<8x128xf32>
    %286 = arith.addf %284, %285 : vector<8x128xf32>
    %287 = math.tanh %286 : vector<8x128xf32>
    %288 = arith.mulf %283, %287 : vector<8x128xf32>
    %289 = arith.truncf %288 : vector<8x128xf32> to vector<8x128xbf16>
    %c6_108 = arith.constant 6 : index
    %c0_109 = arith.constant 0 : index
    %c0_110 = arith.constant 0 : index
    %290 = vector.load %arg6[%c6_108, %c0_109, %c0_110] : memref<8x8x128xbf16, #tpu.memory_space<vmem>>, vector<1x8x128xbf16>
    %291 = vector.shape_cast %290 : vector<1x8x128xbf16> to vector<8x128xbf16>
    %292 = vector.shape_cast %289 : vector<8x128xbf16> to vector<1x8x128xbf16>
    tpu.vector_store %arg6[%c6_108, %c0_109, %c0_110], %292 {strides = array<i32>} : memref<8x8x128xbf16, #tpu.memory_space<vmem>>, vector<1x8x128xbf16>,
    %c7 = arith.constant 7 : index
    %c0_111 = arith.constant 0 : index
    %c0_112 = arith.constant 0 : index
    %293 = vector.load %arg2[%c7, %c0_111, %c0_112] : memref<8x8x512xbf16, #tpu.memory_space<vmem>>, vector<1x8x512xbf16>
    %294 = vector.shape_cast %293 : vector<1x8x512xbf16> to vector<8x512xbf16>
    %295 = arith.extf %294 : vector<8x512xbf16> to vector<8x512xf32>
    %296 = arith.truncf %288 : vector<8x128xf32> to vector<8x128xbf16>
    %cst_113 = arith.constant dense<0.000000e+00> : vector<8x512xf32>
    %297 = tpu.matmul %296, %3, %cst_113 {dimension_numbers = #tpu.dot_dimension_numbers<[1], [0], [0], [1], [0, 0, 1, 1], [], []>} : vector<8x128xbf16>, vector<128x512xbf16>, vector<8x512xf32> -> vector<8x512xf32>
    %298 = arith.addf %295, %297 : vector<8x512xf32>
    %299 = vector.extract_strided_slice %298 {offsets = [0, 0], sizes = [8, 128], strides = [1, 1]} : vector<8x512xf32> to vector<8x128xf32>
    %cst_114 = arith.constant 5.000000e-01 : f32
    %300 = vector.broadcast %cst_114 : f32 to vector<8x128xf32>
    %301 = arith.mulf %300, %299 : vector<8x128xf32>
    %302 = math.tanh %301 : vector<8x128xf32>
    %cst_115 = arith.constant 1.000000e+00 : f32
    %303 = vector.broadcast %cst_115 : f32 to vector<8x128xf32>
    %304 = arith.addf %302, %303 : vector<8x128xf32>
    %cst_116 = arith.constant 5.000000e-01 : f32
    %305 = vector.broadcast %cst_116 : f32 to vector<8x128xf32>
    %306 = arith.mulf %305, %304 : vector<8x128xf32>
    %307 = vector.extract_strided_slice %298 {offsets = [0, 128], sizes = [8, 128], strides = [1, 1]} : vector<8x512xf32> to vector<8x128xf32>
    %cst_117 = arith.constant 5.000000e-01 : f32
    %308 = vector.broadcast %cst_117 : f32 to vector<8x128xf32>
    %309 = arith.mulf %308, %307 : vector<8x128xf32>
    %310 = math.tanh %309 : vector<8x128xf32>
    %cst_118 = arith.constant 1.000000e+00 : f32
    %311 = vector.broadcast %cst_118 : f32 to vector<8x128xf32>
    %312 = arith.addf %310, %311 : vector<8x128xf32>
    %cst_119 = arith.constant 5.000000e-01 : f32
    %313 = vector.broadcast %cst_119 : f32 to vector<8x128xf32>
    %314 = arith.mulf %313, %312 : vector<8x128xf32>
    %315 = vector.extract_strided_slice %298 {offsets = [0, 256], sizes = [8, 128], strides = [1, 1]} : vector<8x512xf32> to vector<8x128xf32>
    %316 = math.tanh %315 : vector<8x128xf32>
    %317 = vector.extract_strided_slice %298 {offsets = [0, 384], sizes = [8, 128], strides = [1, 1]} : vector<8x512xf32> to vector<8x128xf32>
    %cst_120 = arith.constant 5.000000e-01 : f32
    %318 = vector.broadcast %cst_120 : f32 to vector<8x128xf32>
    %319 = arith.mulf %318, %317 : vector<8x128xf32>
    %320 = math.tanh %319 : vector<8x128xf32>
    %cst_121 = arith.constant 1.000000e+00 : f32
    %321 = vector.broadcast %cst_121 : f32 to vector<8x128xf32>
    %322 = arith.addf %320, %321 : vector<8x128xf32>
    %cst_122 = arith.constant 5.000000e-01 : f32
    %323 = vector.broadcast %cst_122 : f32 to vector<8x128xf32>
    %324 = arith.mulf %323, %322 : vector<8x128xf32>
    %325 = arith.mulf %314, %286 : vector<8x128xf32>
    %326 = arith.mulf %306, %316 : vector<8x128xf32>
    %327 = arith.addf %325, %326 : vector<8x128xf32>
    %328 = math.tanh %327 : vector<8x128xf32>
    %329 = arith.mulf %324, %328 : vector<8x128xf32>
    %330 = arith.truncf %329 : vector<8x128xf32> to vector<8x128xbf16>
    %c7_123 = arith.constant 7 : index
    %c0_124 = arith.constant 0 : index
    %c0_125 = arith.constant 0 : index
    %331 = vector.load %arg6[%c7_123, %c0_124, %c0_125] : memref<8x8x128xbf16, #tpu.memory_space<vmem>>, vector<1x8x128xbf16>
    %332 = vector.shape_cast %331 : vector<1x8x128xbf16> to vector<8x128xbf16>
    %333 = vector.shape_cast %330 : vector<8x128xbf16> to vector<1x8x128xbf16>
    tpu.vector_store %arg6[%c7_123, %c0_124, %c0_125], %333 {strides = array<i32>} : memref<8x8x128xbf16, #tpu.memory_space<vmem>>, vector<1x8x128xbf16>,
    %c0_126 = arith.constant 0 : index
    %c0_127 = arith.constant 0 : index
    %334 = vector.load %arg7[%c0_126, %c0_127] : memref<8x128xf32, #tpu.memory_space<vmem>>, vector<8x128xf32>
    tpu.vector_store %arg7[%c0_126, %c0_127], %329 {strides = array<i32>} : memref<8x128xf32, #tpu.memory_space<vmem>>, vector<8x128xf32>,
    %c0_128 = arith.constant 0 : index
    %c0_129 = arith.constant 0 : index
    %335 = vector.load %arg8[%c0_128, %c0_129] : memref<8x128xf32, #tpu.memory_space<vmem>>, vector<8x128xf32>
    tpu.vector_store %arg8[%c0_128, %c0_129], %327 {strides = array<i32>} : memref<8x128xf32, #tpu.memory_space<vmem>>, vector<8x128xf32>,
    return
  }
  func.func @transform_0(%arg0: i32, %arg1: i32) -> (i32, i32, i32) {
    %c0_i32 = arith.constant 0 : i32
    %c0_i32_0 = arith.constant 0 : i32
    return %arg1, %arg0, %c0_i32 : i32, i32, i32
  }
  func.func @transform_1(%arg0: i32, %arg1: i32) -> (i32, i32) {
    %c0_i32 = arith.constant 0 : i32
    %c0_i32_0 = arith.constant 0 : i32
    return %arg0, %c0_i32 : i32, i32
  }
  func.func @transform_2(%arg0: i32, %arg1: i32) -> (i32, i32) {
    %c0_i32 = arith.constant 0 : i32
    %c0_i32_0 = arith.constant 0 : i32
    return %arg0, %c0_i32 : i32, i32
  }
  func.func @transform_3(%arg0: i32, %arg1: i32) -> (i32, i32) {
    %c0_i32 = arith.constant 0 : i32
    %c0_i32_0 = arith.constant 0 : i32
    %c0_i32_1 = arith.constant 0 : i32
    return %c0_i32, %c0_i32_0 : i32, i32
  }
  func.func @transform_4(%arg0: i32, %arg1: i32) -> (i32, i32, i32) {
    %c0_i32 = arith.constant 0 : i32
    %c0_i32_0 = arith.constant 0 : i32
    return %arg1, %arg0, %c0_i32 : i32, i32, i32
  }
}

module attributes {stable_mosaic.version = 11 : i64} {
  func.func @_affine_lse_kernel(%arg0: i32, %arg1: i32, %arg2: memref<16x128xbf16, #tpu.memory_space<vmem>>, %arg3: memref<128x128xbf16, #tpu.memory_space<vmem>>, %arg4: memref<1x128xf32, #tpu.memory_space<vmem>>, %arg5: memref<16x128xf32, #tpu.memory_space<vmem>>, %arg6: memref<16x1xf32, #tpu.memory_space<vmem>>, %arg7: memref<16x1xf32, #tpu.memory_space<vmem>>, %arg8: memref<16x1xf32, #tpu.memory_space<vmem>>) attributes {dimension_semantics = [#tpu.dimension_semantics<parallel>, #tpu.dimension_semantics<arbitrary>], iteration_bounds = array<i64: 1, 1>, scalar_prefetch = 0 : i64, scratch_operands = 2 : i64, tpu.core_type = #tpu.core_type<tc>, window_params = [{transform_indices = @transform_0, window_bounds = array<i64: 16, 128>}, {transform_indices = @transform_1, window_bounds = array<i64: 128, 128>}, {transform_indices = @transform_2, window_bounds = array<i64: 1, 128>}, {transform_indices = @transform_3, window_bounds = array<i64: 16, 128>}, {transform_indices = @transform_4, window_bounds = array<i64: 16, 1>}]} {
    %c0_i32 = arith.constant 0 : i32
    %0 = arith.cmpi eq, %arg1, %c0_i32 : i32
    %1 = arith.extui %0 : i1 to i32
    %c0_i32_0 = arith.constant 0 : i32
    %2 = arith.cmpi ne, %1, %c0_i32_0 : i32
    scf.if %2 {
      %cst_22 = arith.constant 0xFF800000 : f32
      %37 = vector.broadcast %cst_22 : f32 to vector<16x1xf32>
      %c0_23 = arith.constant 0 : index
      %c0_24 = arith.constant 0 : index
      %38 = vector.load %arg7[%c0_23, %c0_24] : memref<16x1xf32, #tpu.memory_space<vmem>>, vector<16x1xf32>
      tpu.vector_store %arg7[%c0_23, %c0_24], %37 {strides = array<i32>} : memref<16x1xf32, #tpu.memory_space<vmem>>, vector<16x1xf32>,
      %cst_25 = arith.constant 0.000000e+00 : f32
      %39 = vector.broadcast %cst_25 : f32 to vector<16x1xf32>
      %c0_26 = arith.constant 0 : index
      %c0_27 = arith.constant 0 : index
      %40 = vector.load %arg8[%c0_26, %c0_27] : memref<16x1xf32, #tpu.memory_space<vmem>>, vector<16x1xf32>
      tpu.vector_store %arg8[%c0_26, %c0_27], %39 {strides = array<i32>} : memref<16x1xf32, #tpu.memory_space<vmem>>, vector<16x1xf32>,
    } else {
    }
    %c0 = arith.constant 0 : index
    %c0_1 = arith.constant 0 : index
    %3 = vector.load %arg2[%c0, %c0_1] : memref<16x128xbf16, #tpu.memory_space<vmem>>, vector<16x128xbf16>
    %c0_2 = arith.constant 0 : index
    %c0_3 = arith.constant 0 : index
    %4 = vector.load %arg3[%c0_2, %c0_3] : memref<128x128xbf16, #tpu.memory_space<vmem>>, vector<128x128xbf16>
    %cst = arith.constant dense<0.000000e+00> : vector<16x128xf32>
    %5 = tpu.matmul %3, %4, %cst {dimension_numbers = #tpu.dot_dimension_numbers<[1], [0], [0], [1], [0, 0, 1, 1], [], []>} : vector<16x128xbf16>, vector<128x128xbf16>, vector<16x128xf32> -> vector<16x128xf32>
    %c0_4 = arith.constant 0 : index
    %c0_5 = arith.constant 0 : index
    %6 = vector.load %arg4[%c0_4, %c0_5] : memref<1x128xf32, #tpu.memory_space<vmem>>, vector<1x128xf32>
    %7 = vector.broadcast %6 : vector<1x128xf32> to vector<16x128xf32>
    %8 = arith.addf %5, %7 : vector<16x128xf32>
    %9 = tpu.iota {dimensions = array<i32: 1>} : vector<16x128xi32>
    %c128_i32 = arith.constant 128 : i32
    %10 = arith.muli %arg1, %c128_i32 : i32
    %11 = vector.broadcast %10 : i32 to vector<16x128xi32>
    %12 = arith.addi %9, %11 : vector<16x128xi32>
    %c128_i32_6 = arith.constant 128 : i32
    %13 = vector.broadcast %c128_i32_6 : i32 to vector<16x128xi32>
    %14 = arith.cmpi slt, %12, %13 : vector<16x128xi32>
    %cst_7 = arith.constant -3.40282347E+38 : f32
    %15 = vector.broadcast %cst_7 : f32 to vector<16x128xf32>
    %16 = arith.select %14, %8, %15 : vector<16x128xi1>, vector<16x128xf32>
    %c0_8 = arith.constant 0 : index
    %c0_9 = arith.constant 0 : index
    %17 = vector.load %arg5[%c0_8, %c0_9] : memref<16x128xf32, #tpu.memory_space<vmem>>, vector<16x128xf32>
    tpu.vector_store %arg5[%c0_8, %c0_9], %16 {strides = array<i32>} : memref<16x128xf32, #tpu.memory_space<vmem>>, vector<16x128xf32>,
    %c0_10 = arith.constant 0 : index
    %c0_11 = arith.constant 0 : index
    %18 = vector.load %arg7[%c0_10, %c0_11] : memref<16x1xf32, #tpu.memory_space<vmem>>, vector<16x1xf32>
    %cst_12 = arith.constant dense<0xFF800000> : vector<16xf32>
    %19 = vector.multi_reduction <maximumf>, %16, %cst_12 [1] : vector<16x128xf32> to vector<16xf32>
    %20 = vector.shape_cast %19 : vector<16xf32> to vector<16x1xf32>
    %21 = arith.maximumf %18, %20 : vector<16x1xf32>
    %c0_13 = arith.constant 0 : index
    %c0_14 = arith.constant 0 : index
    %22 = vector.load %arg8[%c0_13, %c0_14] : memref<16x1xf32, #tpu.memory_space<vmem>>, vector<16x1xf32>
    %23 = arith.subf %18, %21 : vector<16x1xf32>
    %24 = math.exp %23 : vector<16x1xf32>
    %25 = arith.mulf %22, %24 : vector<16x1xf32>
    %26 = vector.broadcast %21 : vector<16x1xf32> to vector<16x128xf32>
    %27 = arith.subf %16, %26 : vector<16x128xf32>
    %28 = math.exp %27 : vector<16x128xf32>
    %cst_15 = arith.constant dense<0.000000e+00> : vector<16xf32>
    %29 = vector.multi_reduction <add>, %28, %cst_15 [1] : vector<16x128xf32> to vector<16xf32>
    %30 = vector.shape_cast %29 : vector<16xf32> to vector<16x1xf32>
    %31 = arith.addf %25, %30 : vector<16x1xf32>
    %c0_16 = arith.constant 0 : index
    %c0_17 = arith.constant 0 : index
    %32 = vector.load %arg8[%c0_16, %c0_17] : memref<16x1xf32, #tpu.memory_space<vmem>>, vector<16x1xf32>
    tpu.vector_store %arg8[%c0_16, %c0_17], %31 {strides = array<i32>} : memref<16x1xf32, #tpu.memory_space<vmem>>, vector<16x1xf32>,
    %c0_18 = arith.constant 0 : index
    %c0_19 = arith.constant 0 : index
    %33 = vector.load %arg7[%c0_18, %c0_19] : memref<16x1xf32, #tpu.memory_space<vmem>>, vector<16x1xf32>
    tpu.vector_store %arg7[%c0_18, %c0_19], %21 {strides = array<i32>} : memref<16x1xf32, #tpu.memory_space<vmem>>, vector<16x1xf32>,
    %c0_i32_20 = arith.constant 0 : i32
    %34 = arith.cmpi eq, %arg1, %c0_i32_20 : i32
    %35 = arith.extui %34 : i1 to i32
    %c0_i32_21 = arith.constant 0 : i32
    %36 = arith.cmpi ne, %35, %c0_i32_21 : i32
    scf.if %36 {
      %c0_22 = arith.constant 0 : index
      %c0_23 = arith.constant 0 : index
      %37 = vector.load %arg7[%c0_22, %c0_23] : memref<16x1xf32, #tpu.memory_space<vmem>>, vector<16x1xf32>
      %c0_24 = arith.constant 0 : index
      %c0_25 = arith.constant 0 : index
      %38 = vector.load %arg8[%c0_24, %c0_25] : memref<16x1xf32, #tpu.memory_space<vmem>>, vector<16x1xf32>
      %39 = math.log %38 : vector<16x1xf32>
      %40 = arith.addf %37, %39 : vector<16x1xf32>
      %c0_26 = arith.constant 0 : index
      %c0_27 = arith.constant 0 : index
      %41 = vector.load %arg6[%c0_26, %c0_27] : memref<16x1xf32, #tpu.memory_space<vmem>>, vector<16x1xf32>
      tpu.vector_store %arg6[%c0_26, %c0_27], %40 {strides = array<i32>} : memref<16x1xf32, #tpu.memory_space<vmem>>, vector<16x1xf32>,
    } else {
    }
    return
  }
  func.func @transform_0(%arg0: i32, %arg1: i32) -> (i32, i32) {
    %c0_i32 = arith.constant 0 : i32
    %c0_i32_0 = arith.constant 0 : i32
    return %arg0, %c0_i32 : i32, i32
  }
  func.func @transform_1(%arg0: i32, %arg1: i32) -> (i32, i32) {
    %c0_i32 = arith.constant 0 : i32
    %c0_i32_0 = arith.constant 0 : i32
    return %c0_i32, %arg1 : i32, i32
  }
  func.func @transform_2(%arg0: i32, %arg1: i32) -> (i32, i32) {
    %c0_i32 = arith.constant 0 : i32
    %c0_i32_0 = arith.constant 0 : i32
    return %c0_i32, %arg1 : i32, i32
  }
  func.func @transform_3(%arg0: i32, %arg1: i32) -> (i32, i32) {
    %c0_i32 = arith.constant 0 : i32
    return %arg0, %arg1 : i32, i32
  }
  func.func @transform_4(%arg0: i32, %arg1: i32) -> (i32, i32) {
    %c0_i32 = arith.constant 0 : i32
    %c0_i32_0 = arith.constant 0 : i32
    return %arg0, %c0_i32 : i32, i32
  }
}

</mosaic_0001>

<llo_original>
// kernel: lstm_generator_forward.3
$region0: #{lstm_generator_forward.3}
  #allocation0 [shape = 'u32[]', space=smem, size = 0x4, offset = 0x4, fixed_abs, tag = 'smem constant byte address 0x4 - core index']
  #allocation1 [shape = 'u32[144,128]{1,0:T(1,128)}', space=vmem, size = 0x12000, scoped, tag = 'internal scratch']
  %s0 = inlined_call_operand.vmem [shape: bf16[64,128], index: 0, kind: input, shape index: {}]
  %s1 = inlined_call_operand.vmem [shape: bf16[128,512], index: 1, kind: input, shape index: {}]
  %s2 = inlined_call_operand.vmem [shape: f32[1,512], index: 2, kind: input, shape index: {}]
  %s3 = inlined_call_operand.vmem [shape: bf16[64,512], index: 3, kind: output, shape index: {}]
  %s4 = sld [smem:[#allocation0]]
  $region22: #{lstm_generator_forward.3} parent=0
    _
  %s6 = ssub.s32 1, %s4
  %s7 = scalar_select 0, %s6, %s4
  // Predicated region
  $region2: #{lstm_generator_forward.3} parent=0 // pred_check
    _
  $region3: #{lstm_generator_forward.3} parent=0 // pred_check_branch
    %9 = sbr.rel (0) target = $region5
  $region4: #{lstm_generator_forward.3} parent=0 // pred_region
    _
  $region5: #{lstm_generator_forward.3} parent=0 // pred_fallthru
    _
  // Predicated region
  $region6: #{lstm_generator_forward.3} parent=0 // pred_check
    _
  $region7: #{lstm_generator_forward.3} parent=0 // pred_check_branch
    %11 = sbr.rel (0) target = $region9
  $region8: #{lstm_generator_forward.3} parent=0 // pred_region
    _
  $region9: #{lstm_generator_forward.3} parent=0 // pred_fallthru
    _
  // Predicated region
  $region10: #{lstm_generator_forward.3} parent=0 // pred_check
    _
  $region11: #{lstm_generator_forward.3} parent=0 // pred_check_branch
    %13 = sbr.rel (0) target = $region13
  $region12: #{lstm_generator_forward.3} parent=0 // pred_region
    _
  $region13: #{lstm_generator_forward.3} parent=0 // pred_fallthru
    _
  %v15 = vld [vmem:[%s0] sm:$0xf]
  %v16 = vld [vmem:[%s0 + $0x4] sm:$0xf]
  %v17 = vld [vmem:[%s0 + $0x8] sm:$0xf]
  %v18 = vld [vmem:[%s0 + $0xc] sm:$0xf]
  %v19 = vld [vmem:[%s0 + $0x10] sm:$0xf]
  %v20 = vld [vmem:[%s0 + $0x14] sm:$0xf]
  %v21 = vld [vmem:[%s0 + $0x18] sm:$0xf]
  %v22 = vld [vmem:[%s0 + $0x1c] sm:$0xf]
  %v23 = vld [vmem:[%s1] sm:$0xff]
  %v24 = vld [vmem:[%s1 + $0x8] sm:$0xff]
  %v25 = vld [vmem:[%s1 + $0x10] sm:$0xff]
  %v26 = vld [vmem:[%s1 + $0x18] sm:$0xff]
  %v27 = vld [vmem:[%s1 + $0x20] sm:$0xff]
  %v28 = vld [vmem:[%s1 + $0x28] sm:$0xff]
  %v29 = vld [vmem:[%s1 + $0x30] sm:$0xff]
  %v30 = vld [vmem:[%s1 + $0x38] sm:$0xff]
  %v31 = vld [vmem:[%s1 + $0x40] sm:$0xff]
  %v32 = vld [vmem:[%s1 + $0x48] sm:$0xff]
  %v33 = vld [vmem:[%s1 + $0x50] sm:$0xff]
  %v34 = vld [vmem:[%s1 + $0x58] sm:$0xff]
  %v35 = vld [vmem:[%s1 + $0x60] sm:$0xff]
  %v36 = vld [vmem:[%s1 + $0x68] sm:$0xff]
  %v37 = vld [vmem:[%s1 + $0x70] sm:$0xff]
  %v38 = vld [vmem:[%s1 + $0x78] sm:$0xff]
  %v39 = vld [vmem:[%s1 + $0x80] sm:$0xff]
  %v40 = vld [vmem:[%s1 + $0x88] sm:$0xff]
  %v41 = vld [vmem:[%s1 + $0x90] sm:$0xff]
  %v42 = vld [vmem:[%s1 + $0x98] sm:$0xff]
  %v43 = vld [vmem:[%s1 + $0xa0] sm:$0xff]
  %v44 = vld [vmem:[%s1 + $0xa8] sm:$0xff]
  %v45 = vld [vmem:[%s1 + $0xb0] sm:$0xff]
  %v46 = vld [vmem:[%s1 + $0xb8] sm:$0xff]
  %v47 = vld [vmem:[%s1 + $0xc0] sm:$0xff]
  %v48 = vld [vmem:[%s1 + $0xc8] sm:$0xff]
  %v49 = vld [vmem:[%s1 + $0xd0] sm:$0xff]
  %v50 = vld [vmem:[%s1 + $0xd8] sm:$0xff]
  %v51 = vld [vmem:[%s1 + $0xe0] sm:$0xff]
  %v52 = vld [vmem:[%s1 + $0xe8] sm:$0xff]
  %v53 = vld [vmem:[%s1 + $0xf0] sm:$0xff]
  %v54 = vld [vmem:[%s1 + $0xf8] sm:$0xff]
  %v55 = vld [vmem:[%s2] sm:$0xf]
  %v57 = vlaneseq
  %v58 = vshrl.u32 %v57, 7
  %v59 = vsub.s32 0, %v58
  %v60 = vrot.slane %v55, %v59
  %v61 = vlaneseq
  %v62 = vshrl.u32 %v61, 7
  %v63 = vsub.s32 1, %v62
  %v64 = vrot.slane %v55, %v63
  %v65 = vlaneseq
  %v66 = vshrl.u32 %v65, 7
  %v67 = vsub.s32 2, %v66
  %v68 = vrot.slane %v55, %v67
  %v69 = vlaneseq
  %v70 = vshrl.u32 %v69, 7
  %v71 = vsub.s32 3, %v70
  %v72 = vrot.slane %v55, %v71
  %v85 = vunpack.c.l.b16 %v15
  %v86 = vunpack.c.l.b16 %v16
  %v87 = vunpack.c.l.b16 %v17
  %v88 = vunpack.c.l.b16 %v18
  %v89 = vunpack.c.l.b16 %v19
  %v90 = vunpack.c.l.b16 %v20
  %v91 = vunpack.c.l.b16 %v21
  %v92 = vunpack.c.l.b16 %v22
  %v93 = vpack.c.b16 %v86, %v85
  %v94 = vpack.c.b16 %v88, %v87
  %v95 = vpack.c.b16 %v90, %v89
  %v96 = vpack.c.b16 %v92, %v91
  %v133 = vunpack.c.l.b16 %v23
  %v134 = vunpack.c.h.b16 %v23
  %v135 = vunpack.c.l.b16 %v24
  %v136 = vunpack.c.h.b16 %v24
  %v137 = vunpack.c.l.b16 %v25
  %v138 = vunpack.c.h.b16 %v25
  %v139 = vunpack.c.l.b16 %v26
  %v140 = vunpack.c.h.b16 %v26
  %v141 = vunpack.c.l.b16 %v27
  %v142 = vunpack.c.h.b16 %v27
  %v143 = vunpack.c.l.b16 %v28
  %v144 = vunpack.c.h.b16 %v28
  %v145 = vunpack.c.l.b16 %v29
  %v146 = vunpack.c.h.b16 %v29
  %v147 = vunpack.c.l.b16 %v30
  %v148 = vunpack.c.h.b16 %v30
  %v149 = vunpack.c.l.b16 %v31
  %v150 = vunpack.c.h.b16 %v31
  %v151 = vunpack.c.l.b16 %v32
  %v152 = vunpack.c.h.b16 %v32
  %v153 = vunpack.c.l.b16 %v33
  %v154 = vunpack.c.h.b16 %v33
  %v155 = vunpack.c.l.b16 %v34
  %v156 = vunpack.c.h.b16 %v34
  %v157 = vunpack.c.l.b16 %v35
  %v158 = vunpack.c.h.b16 %v35
  %v159 = vunpack.c.l.b16 %v36
  %v160 = vunpack.c.h.b16 %v36
  %v161 = vunpack.c.l.b16 %v37
  %v162 = vunpack.c.h.b16 %v37
  %v163 = vunpack.c.l.b16 %v38
  %v164 = vunpack.c.h.b16 %v38
  %v165 = vunpack.c.l.b16 %v39
  %v166 = vunpack.c.h.b16 %v39
  %v167 = vunpack.c.l.b16 %v40
  %v168 = vunpack.c.h.b16 %v40
  %v169 = vunpack.c.l.b16 %v41
  %v170 = vunpack.c.h.b16 %v41
  %v171 = vunpack.c.l.b16 %v42
  %v172 = vunpack.c.h.b16 %v42
  %v173 = vunpack.c.l.b16 %v43
  %v174 = vunpack.c.h.b16 %v43
  %v175 = vunpack.c.l.b16 %v44
  %v176 = vunpack.c.h.b16 %v44
  %v177 = vunpack.c.l.b16 %v45
  %v178 = vunpack.c.h.b16 %v45
  %v179 = vunpack.c.l.b16 %v46
  %v180 = vunpack.c.h.b16 %v46
  %v181 = vunpack.c.l.b16 %v47
  %v182 = vunpack.c.h.b16 %v47
  %v183 = vunpack.c.l.b16 %v48
  %v184 = vunpack.c.h.b16 %v48
  %v185 = vunpack.c.l.b16 %v49
  %v186 = vunpack.c.h.b16 %v49
  %v187 = vunpack.c.l.b16 %v50
  %v188 = vunpack.c.h.b16 %v50
  %v189 = vunpack.c.l.b16 %v51
  %v190 = vunpack.c.h.b16 %v51
  %v191 = vunpack.c.l.b16 %v52
  %v192 = vunpack.c.h.b16 %v52
  %v193 = vunpack.c.l.b16 %v53
  %v194 = vunpack.c.h.b16 %v53
  %v195 = vunpack.c.l.b16 %v54
  %v196 = vunpack.c.h.b16 %v54
  %v197 = vpack.c.b16 %v137, %v133
  %v198 = vpack.c.b16 %v138, %v134
  %v199 = vpack.c.b16 %v139, %v135
  %v200 = vpack.c.b16 %v140, %v136
  %v201 = vpack.c.b16 %v145, %v141
  %v202 = vpack.c.b16 %v146, %v142
  %v203 = vpack.c.b16 %v147, %v143
  %v204 = vpack.c.b16 %v148, %v144
  %v205 = vpack.c.b16 %v153, %v149
  %v206 = vpack.c.b16 %v154, %v150
  %v207 = vpack.c.b16 %v155, %v151
  %v208 = vpack.c.b16 %v156, %v152
  %v209 = vpack.c.b16 %v161, %v157
  %v210 = vpack.c.b16 %v162, %v158
  %v211 = vpack.c.b16 %v163, %v159
  %v212 = vpack.c.b16 %v164, %v160
  %v213 = vpack.c.b16 %v169, %v165
  %v214 = vpack.c.b16 %v170, %v166
  %v215 = vpack.c.b16 %v171, %v167
  %v216 = vpack.c.b16 %v172, %v168
  %v217 = vpack.c.b16 %v177, %v173
  %v218 = vpack.c.b16 %v178, %v174
  %v219 = vpack.c.b16 %v179, %v175
  %v220 = vpack.c.b16 %v180, %v176
  %v221 = vpack.c.b16 %v185, %v181
  %v222 = vpack.c.b16 %v186, %v182
  %v223 = vpack.c.b16 %v187, %v183
  %v224 = vpack.c.b16 %v188, %v184
  %v225 = vpack.c.b16 %v193, %v189
  %v226 = vpack.c.b16 %v194, %v190
  %v227 = vpack.c.b16 %v195, %v191
  %v228 = vpack.c.b16 %v196, %v192
  %261 = vmatprep.subr.bf16.mxu0 %v198
  %262 = vmatpush1.bf16.msra.mxu0 %v197
  %263 = vmatprep.subr.bf16.mxu0 %v202
  %264 = vmatpush1.bf16.msra.mxu0 %v201
  %265 = vmatprep.subr.bf16.mxu0 %v206
  %266 = vmatpush1.bf16.msra.mxu0 %v205
  %267 = vmatprep.subr.bf16.mxu0 %v210
  %268 = vmatpush1.bf16.msra.mxu0 %v209
  %269 = vmatprep.subr.bf16.mxu0 %v214
  %270 = vmatpush1.bf16.msra.mxu0 %v213
  %271 = vmatprep.subr.bf16.mxu0 %v218
  %272 = vmatpush1.bf16.msra.mxu0 %v217
  %273 = vmatprep.subr.bf16.mxu0 %v222
  %274 = vmatpush1.bf16.msra.mxu0 %v221
  %275 = vmatprep.subr.bf16.mxu0 %v226
  %276 = vmatpush1.bf16.msra.mxu0 %v225
  %277 = vmatprep.subr.bf16.mxu0 0
  %278 = vmatpush1.bf16.msra.mxu0 0
  %279 = vmatprep.subr.bf16.mxu0 0
  %280 = vmatpush1.bf16.msra.mxu0 0
  %281 = vmatprep.subr.bf16.mxu0 0
  %282 = vmatpush1.bf16.msra.mxu0 0
  %283 = vmatprep.subr.bf16.mxu0 0
  %284 = vmatpush1.bf16.msra.mxu0 0
  %285 = vmatprep.subr.bf16.mxu0 0
  %286 = vmatpush1.bf16.msra.mxu0 0
  %287 = vmatprep.subr.bf16.mxu0 0
  %288 = vmatpush1.bf16.msra.mxu0 0
  %289 = vmatprep.subr.bf16.mxu0 0
  %290 = vmatpush1.bf16.msra.mxu0 0
  %291 = vmatprep.subr.bf16.mxu0 0
  %292 = vmatpush1.bf16.msra.mxu0 0
  %293 = vmatprep.mubr.bf16.mxu0 0
  %294 = vmatmul.mubr.bf16.gmra.mrb[0].mxu0 %v93
  %v295 = vpop.f32.mrb[0].mxu0
  %v296 = vadd.f32 %v60, %v295
  %v297 = vpop.f32.mrb[0].mxu0
  %v298 = vadd.f32 %v64, %v297
  %v299 = vpop.f32.mrb[0].mxu0
  %v300 = vadd.f32 %v60, %v299
  %v301 = vpop.f32.mrb[0].mxu0
  %v302 = vadd.f32 %v64, %v301
  %303 = vmatprep.mubr.bf16.mxu0 0
  %304 = vmatmul.mubr.bf16.gmra.mrb[0].mxu0 %v94
  %v305 = vpop.f32.mrb[0].mxu0
  %v306 = vadd.f32 %v60, %v305
  %v307 = vpop.f32.mrb[0].mxu0
  %v308 = vadd.f32 %v64, %v307
  %v309 = vpop.f32.mrb[0].mxu0
  %v310 = vadd.f32 %v60, %v309
  %v311 = vpop.f32.mrb[0].mxu0
  %v312 = vadd.f32 %v64, %v311
  %313 = vmatprep.mubr.bf16.mxu0 0
  %314 = vmatmul.mubr.bf16.gmra.mrb[0].mxu0 %v95
  %v315 = vpop.f32.mrb[0].mxu0
  %v316 = vadd.f32 %v60, %v315
  %v317 = vpop.f32.mrb[0].mxu0
  %v318 = vadd.f32 %v64, %v317
  %v319 = vpop.f32.mrb[0].mxu0
  %v320 = vadd.f32 %v60, %v319
  %v321 = vpop.f32.mrb[0].mxu0
  %v322 = vadd.f32 %v64, %v321
  %323 = vmatprep.mubr.bf16.mxu0 0
  %324 = vmatmul.mubr.bf16.gmra.mrb[0].mxu0 %v96
  %v325 = vpop.f32.mrb[0].mxu0
  %v326 = vadd.f32 %v60, %v325
  %v327 = vpop.f32.mrb[0].mxu0
  %v328 = vadd.f32 %v64, %v327
  %v329 = vpop.f32.mrb[0].mxu0
  %v330 = vadd.f32 %v60, %v329
  %v331 = vpop.f32.mrb[0].mxu0
  %v332 = vadd.f32 %v64, %v331
  %333 = vdwg.mxu0
  %334 = vmatprep.subr.bf16.mxu0 %v200
  %335 = vmatpush1.bf16.msra.mxu0 %v199
  %336 = vmatprep.subr.bf16.mxu0 %v204
  %337 = vmatpush1.bf16.msra.mxu0 %v203
  %338 = vmatprep.subr.bf16.mxu0 %v208
  %339 = vmatpush1.bf16.msra.mxu0 %v207
  %340 = vmatprep.subr.bf16.mxu0 %v212
  %341 = vmatpush1.bf16.msra.mxu0 %v211
  %342 = vmatprep.subr.bf16.mxu0 %v216
  %343 = vmatpush1.bf16.msra.mxu0 %v215
  %344 = vmatprep.subr.bf16.mxu0 %v220
  %345 = vmatpush1.bf16.msra.mxu0 %v219
  %346 = vmatprep.subr.bf16.mxu0 %v224
  %347 = vmatpush1.bf16.msra.mxu0 %v223
  %348 = vmatprep.subr.bf16.mxu0 %v228
  %349 = vmatpush1.bf16.msra.mxu0 %v227
  %350 = vmatprep.subr.bf16.mxu0 0
  %351 = vmatpush1.bf16.msra.mxu0 0
  %352 = vmatprep.subr.bf16.mxu0 0
  %353 = vmatpush1.bf16.msra.mxu0 0
  %354 = vmatprep.subr.bf16.mxu0 0
  %355 = vmatpush1.bf16.msra.mxu0 0
  %356 = vmatprep.subr.bf16.mxu0 0
  %357 = vmatpush1.bf16.msra.mxu0 0
  %358 = vmatprep.subr.bf16.mxu0 0
  %359 = vmatpush1.bf16.msra.mxu0 0
  %360 = vmatprep.subr.bf16.mxu0 0
  %361 = vmatpush1.bf16.msra.mxu0 0
  %362 = vmatprep.subr.bf16.mxu0 0
  %363 = vmatpush1.bf16.msra.mxu0 0
  %364 = vmatprep.subr.bf16.mxu0 0
  %365 = vmatpush1.bf16.msra.mxu0 0
  %366 = vmatprep.mubr.bf16.mxu0 0
  %367 = vmatmul.mubr.bf16.gmra.mrb[0].mxu0 %v93
  %v368 = vpop.f32.mrb[0].mxu0
  %v369 = vadd.f32 %v68, %v368
  %v370 = vpop.f32.mrb[0].mxu0
  %v371 = vadd.f32 %v72, %v370
  %v372 = vpop.f32.mrb[0].mxu0
  %v373 = vadd.f32 %v68, %v372
  %v374 = vpop.f32.mrb[0].mxu0
  %v375 = vadd.f32 %v72, %v374
  %376 = vmatprep.mubr.bf16.mxu0 0
  %377 = vmatmul.mubr.bf16.gmra.mrb[0].mxu0 %v94
  %v378 = vpop.f32.mrb[0].mxu0
  %v379 = vadd.f32 %v68, %v378
  %v380 = vpop.f32.mrb[0].mxu0
  %v381 = vadd.f32 %v72, %v380
  %v382 = vpop.f32.mrb[0].mxu0
  %v383 = vadd.f32 %v68, %v382
  %v384 = vpop.f32.mrb[0].mxu0
  %v385 = vadd.f32 %v72, %v384
  %386 = vmatprep.mubr.bf16.mxu0 0
  %387 = vmatmul.mubr.bf16.gmra.mrb[0].mxu0 %v95
  %v388 = vpop.f32.mrb[0].mxu0
  %v389 = vadd.f32 %v68, %v388
  %v390 = vpop.f32.mrb[0].mxu0
  %v391 = vadd.f32 %v72, %v390
  %v392 = vpop.f32.mrb[0].mxu0
  %v393 = vadd.f32 %v68, %v392
  %v394 = vpop.f32.mrb[0].mxu0
  %v395 = vadd.f32 %v72, %v394
  %396 = vmatprep.mubr.bf16.mxu0 0
  %397 = vmatmul.mubr.bf16.gmra.mrb[0].mxu0 %v96
  %v398 = vpop.f32.mrb[0].mxu0
  %v399 = vadd.f32 %v68, %v398
  %v400 = vpop.f32.mrb[0].mxu0
  %v401 = vadd.f32 %v72, %v400
  %v402 = vpop.f32.mrb[0].mxu0
  %v403 = vadd.f32 %v68, %v402
  %v404 = vpop.f32.mrb[0].mxu0
  %v405 = vadd.f32 %v72, %v404
  %406 = vdwg.mxu0
  %v407 = vpack.c.bf16 %v300, %v296
  %v408 = vpack.c.bf16 %v302, %v298
  %v409 = vpack.c.bf16 %v373, %v369
  %v410 = vpack.c.bf16 %v375, %v371
  %v411 = vpack.c.bf16 %v310, %v306
  %v412 = vpack.c.bf16 %v312, %v308
  %v413 = vpack.c.bf16 %v383, %v379
  %v414 = vpack.c.bf16 %v385, %v381
  %v415 = vpack.c.bf16 %v320, %v316
  %v416 = vpack.c.bf16 %v322, %v318
  %v417 = vpack.c.bf16 %v393, %v389
  %v418 = vpack.c.bf16 %v395, %v391
  %v419 = vpack.c.bf16 %v330, %v326
  %v420 = vpack.c.bf16 %v332, %v328
  %v421 = vpack.c.bf16 %v403, %v399
  %v422 = vpack.c.bf16 %v405, %v401
  %v439 = vunpack.c.l.b16 %v407
  %v440 = vunpack.c.l.b16 %v408
  %v441 = vunpack.c.l.b16 %v409
  %v442 = vunpack.c.l.b16 %v410
  %v443 = vunpack.c.h.b16 %v407
  %v444 = vunpack.c.h.b16 %v408
  %v445 = vunpack.c.h.b16 %v409
  %v446 = vunpack.c.h.b16 %v410
  %v447 = vunpack.c.l.b16 %v411
  %v448 = vunpack.c.l.b16 %v412
  %v449 = vunpack.c.l.b16 %v413
  %v450 = vunpack.c.l.b16 %v414
  %v451 = vunpack.c.h.b16 %v411
  %v452 = vunpack.c.h.b16 %v412
  %v453 = vunpack.c.h.b16 %v413
  %v454 = vunpack.c.h.b16 %v414
  %v455 = vunpack.c.l.b16 %v415
  %v456 = vunpack.c.l.b16 %v416
  %v457 = vunpack.c.l.b16 %v417
  %v458 = vunpack.c.l.b16 %v418
  %v459 = vunpack.c.h.b16 %v415
  %v460 = vunpack.c.h.b16 %v416
  %v461 = vunpack.c.h.b16 %v417
  %v462 = vunpack.c.h.b16 %v418
  %v463 = vunpack.c.l.b16 %v419
  %v464 = vunpack.c.l.b16 %v420
  %v465 = vunpack.c.l.b16 %v421
  %v466 = vunpack.c.l.b16 %v422
  %v467 = vunpack.c.h.b16 %v419
  %v468 = vunpack.c.h.b16 %v420
  %v469 = vunpack.c.h.b16 %v421
  %v470 = vunpack.c.h.b16 %v422
  %v471 = vpack.c.b16 %v440, %v439
  %v472 = vpack.c.b16 %v442, %v441
  %v473 = vpack.c.b16 %v444, %v443
  %v474 = vpack.c.b16 %v446, %v445
  %v475 = vpack.c.b16 %v448, %v447
  %v476 = vpack.c.b16 %v450, %v449
  %v477 = vpack.c.b16 %v452, %v451
  %v478 = vpack.c.b16 %v454, %v453
  %v479 = vpack.c.b16 %v456, %v455
  %v480 = vpack.c.b16 %v458, %v457
  %v481 = vpack.c.b16 %v460, %v459
  %v482 = vpack.c.b16 %v462, %v461
  %v483 = vpack.c.b16 %v464, %v463
  %v484 = vpack.c.b16 %v466, %v465
  %v485 = vpack.c.b16 %v468, %v467
  %v486 = vpack.c.b16 %v470, %v469
  %503 = vst [vmem:[%s3] sm:$0xff] %v471
  %504 = vst [vmem:[%s3 + $0x8] sm:$0xff] %v472
  %505 = vst [vmem:[%s3 + $0x10] sm:$0xff] %v473
  %506 = vst [vmem:[%s3 + $0x18] sm:$0xff] %v474
  %507 = vst [vmem:[%s3 + $0x20] sm:$0xff] %v475
  %508 = vst [vmem:[%s3 + $0x28] sm:$0xff] %v476
  %509 = vst [vmem:[%s3 + $0x30] sm:$0xff] %v477
  %510 = vst [vmem:[%s3 + $0x38] sm:$0xff] %v478
  %511 = vst [vmem:[%s3 + $0x40] sm:$0xff] %v479
  %512 = vst [vmem:[%s3 + $0x48] sm:$0xff] %v480
  %513 = vst [vmem:[%s3 + $0x50] sm:$0xff] %v481
  %514 = vst [vmem:[%s3 + $0x58] sm:$0xff] %v482
  %515 = vst [vmem:[%s3 + $0x60] sm:$0xff] %v483
  %516 = vst [vmem:[%s3 + $0x68] sm:$0xff] %v484
  %517 = vst [vmem:[%s3 + $0x70] sm:$0xff] %v485
  %518 = vst [vmem:[%s3 + $0x78] sm:$0xff] %v486
  // Predicated region
  $region14: #{lstm_generator_forward.3} parent=0 // pred_check
    _
  $region15: #{lstm_generator_forward.3} parent=0 // pred_check_branch
    %520 = sbr.rel (0) target = $region17
  $region16: #{lstm_generator_forward.3} parent=0 // pred_region
    _
  $region17: #{lstm_generator_forward.3} parent=0 // pred_fallthru
    _
  // Predicated region
  $region18: #{lstm_generator_forward.3} parent=0 // pred_check
    _
  $region19: #{lstm_generator_forward.3} parent=0 // pred_check_branch
    %522 = sbr.rel (0) target = $region21
  $region20: #{lstm_generator_forward.3} parent=0 // pred_region
    _
  $region21: #{lstm_generator_forward.3} parent=0 // pred_fallthru
    _

// kernel: lstm_generator_forward.4
$region0: #{lstm_generator_forward.4}
  #allocation0 [shape = 'u32[]', space=smem, size = 0x4, offset = 0x4, fixed_abs, tag = 'smem constant byte address 0x4 - core index']
  #allocation1 [shape = 'u32[144,128]{1,0:T(1,128)}', space=vmem, size = 0x12000, scoped, tag = 'internal scratch']
  #allocation2 [shape = 'f32[8,128]{1,0:T(8,128)}', space=vmem, size = 0x1000, scoped, tag = 'scratch operand']
  #allocation3 [shape = 'f32[8,128]{1,0:T(8,128)}', space=vmem, size = 0x1000, scoped, tag = 'scratch operand']
  %s0 = inlined_call_operand.vmem [shape: bf16[8,8,512], index: 0, kind: input, shape index: {}]
  %s1 = inlined_call_operand.vmem [shape: f32[8,128], index: 1, kind: input, shape index: {}]
  %s2 = inlined_call_operand.vmem [shape: f32[8,128], index: 2, kind: input, shape index: {}]
  %s3 = inlined_call_operand.vmem [shape: bf16[128,512], index: 3, kind: input, shape index: {}]
  %s4 = inlined_call_operand.vmem [shape: bf16[8,8,128], index: 4, kind: output, shape index: {}]
  %s5 = sld [smem:[#allocation0]]
  $region30: #{lstm_generator_forward.4} parent=0
    _
  %s7 = ssub.s32 1, %s5
  %s8 = scalar_select 0, %s7, %s5
  // Predicated region
  $region2: #{lstm_generator_forward.4} parent=0 // pred_check
    _
  $region3: #{lstm_generator_forward.4} parent=0 // pred_check_branch
    %10 = sbr.rel (0) target = $region5
  $region4: #{lstm_generator_forward.4} parent=0 // pred_region
    _
  $region5: #{lstm_generator_forward.4} parent=0 // pred_fallthru
    _
  // Predicated region
  $region6: #{lstm_generator_forward.4} parent=0 // pred_check
    _
  $region7: #{lstm_generator_forward.4} parent=0 // pred_check_branch
    %12 = sbr.rel (0) target = $region9
  $region8: #{lstm_generator_forward.4} parent=0 // pred_region
    _
  $region9: #{lstm_generator_forward.4} parent=0 // pred_fallthru
    _
  // Predicated region
  $region10: #{lstm_generator_forward.4} parent=0 // pred_check
    _
  $region11: #{lstm_generator_forward.4} parent=0 // pred_check_branch
    %14 = sbr.rel (0) target = $region13
  $region12: #{lstm_generator_forward.4} parent=0 // pred_region
    _
  $region13: #{lstm_generator_forward.4} parent=0 // pred_fallthru
    _
  // Predicated region
  $region14: #{lstm_generator_forward.4} parent=0 // pred_check
    _
  $region15: #{lstm_generator_forward.4} parent=0 // pred_check_branch
    %16 = sbr.rel (0) target = $region17
  $region16: #{lstm_generator_forward.4} parent=0 // pred_region
    _
  $region17: #{lstm_generator_forward.4} parent=0 // pred_fallthru
    _
  %p18 = scmp.eq.s32.totalorder 0, 0
  // Predicated region
  $region18: #{lstm_generator_forward.4} parent=0 // pred_check
    %p19 = pneg %p18
  $region19: #{lstm_generator_forward.4} parent=0 // pred_check_branch
    %21 = sbr.rel (%p19) target = $region21
  $region20: #{lstm_generator_forward.4} parent=0 // pred_region
    %v22 = vld [vmem:[%s1] sm:$0xff]
    %23 = vst [vmem:[#allocation2] sm:$0xff] %v22
    %v24 = vld [vmem:[%s2] sm:$0xff]
    %25 = vst [vmem:[#allocation3] sm:$0xff] %v24
  $region21: #{lstm_generator_forward.4} parent=0 // pred_fallthru
    _
  %v26 = vld [vmem:[%s3] sm:$0xff]
  %v27 = vld [vmem:[%s3 + $0x8] sm:$0xff]
  %v28 = vld [vmem:[%s3 + $0x10] sm:$0xff]
  %v29 = vld [vmem:[%s3 + $0x18] sm:$0xff]
  %v30 = vld [vmem:[%s3 + $0x20] sm:$0xff]
  %v31 = vld [vmem:[%s3 + $0x28] sm:$0xff]
  %v32 = vld [vmem:[%s3 + $0x30] sm:$0xff]
  %v33 = vld [vmem:[%s3 + $0x38] sm:$0xff]
  %v34 = vld [vmem:[%s3 + $0x40] sm:$0xff]
  %v35 = vld [vmem:[%s3 + $0x48] sm:$0xff]
  %v36 = vld [vmem:[%s3 + $0x50] sm:$0xff]
  %v37 = vld [vmem:[%s3 + $0x58] sm:$0xff]
  %v38 = vld [vmem:[%s3 + $0x60] sm:$0xff]
  %v39 = vld [vmem:[%s3 + $0x68] sm:$0xff]
  %v40 = vld [vmem:[%s3 + $0x70] sm:$0xff]
  %v41 = vld [vmem:[%s3 + $0x78] sm:$0xff]
  %v42 = vld [vmem:[%s3 + $0x80] sm:$0xff]
  %v43 = vld [vmem:[%s3 + $0x88] sm:$0xff]
  %v44 = vld [vmem:[%s3 + $0x90] sm:$0xff]
  %v45 = vld [vmem:[%s3 + $0x98] sm:$0xff]
  %v46 = vld [vmem:[%s3 + $0xa0] sm:$0xff]
  %v47 = vld [vmem:[%s3 + $0xa8] sm:$0xff]
  %v48 = vld [vmem:[%s3 + $0xb0] sm:$0xff]
  %v49 = vld [vmem:[%s3 + $0xb8] sm:$0xff]
  %v50 = vld [vmem:[%s3 + $0xc0] sm:$0xff]
  %v51 = vld [vmem:[%s3 + $0xc8] sm:$0xff]
  %v52 = vld [vmem:[%s3 + $0xd0] sm:$0xff]
  %v53 = vld [vmem:[%s3 + $0xd8] sm:$0xff]
  %v54 = vld [vmem:[%s3 + $0xe0] sm:$0xff]
  %v55 = vld [vmem:[%s3 + $0xe8] sm:$0xff]
  %v56 = vld [vmem:[%s3 + $0xf0] sm:$0xff]
  %v57 = vld [vmem:[%s3 + $0xf8] sm:$0xff]
  %v58 = vld [vmem:[#allocation2] sm:$0xff]
  %v59 = vld [vmem:[#allocation3] sm:$0xff]
  %v60 = vld [vmem:[%s0] sm:$0xff]
  %v61 = vld [vmem:[%s0 + $0x8] sm:$0xff]
  %v62 = vunpack.c.l.bf16 %v60
  %v63 = vunpack.c.h.bf16 %v60
  %v64 = vunpack.c.l.bf16 %v61
  %v65 = vunpack.c.h.bf16 %v61
  %v66 = vpack.c.bf16 %v58, %v58
  %v99 = vunpack.c.l.b16 %v26
  %v100 = vunpack.c.h.b16 %v26
  %v101 = vunpack.c.l.b16 %v27
  %v102 = vunpack.c.h.b16 %v27
  %v103 = vunpack.c.l.b16 %v28
  %v104 = vunpack.c.h.b16 %v28
  %v105 = vunpack.c.l.b16 %v29
  %v106 = vunpack.c.h.b16 %v29
  %v107 = vunpack.c.l.b16 %v30
  %v108 = vunpack.c.h.b16 %v30
  %v109 = vunpack.c.l.b16 %v31
  %v110 = vunpack.c.h.b16 %v31
  %v111 = vunpack.c.l.b16 %v32
  %v112 = vunpack.c.h.b16 %v32
  %v113 = vunpack.c.l.b16 %v33
  %v114 = vunpack.c.h.b16 %v33
  %v115 = vunpack.c.l.b16 %v34
  %v116 = vunpack.c.h.b16 %v34
  %v117 = vunpack.c.l.b16 %v35
  %v118 = vunpack.c.h.b16 %v35
  %v119 = vunpack.c.l.b16 %v36
  %v120 = vunpack.c.h.b16 %v36
  %v121 = vunpack.c.l.b16 %v37
  %v122 = vunpack.c.h.b16 %v37
  %v123 = vunpack.c.l.b16 %v38
  %v124 = vunpack.c.h.b16 %v38
  %v125 = vunpack.c.l.b16 %v39
  %v126 = vunpack.c.h.b16 %v39
  %v127 = vunpack.c.l.b16 %v40
  %v128 = vunpack.c.h.b16 %v40
  %v129 = vunpack.c.l.b16 %v41
  %v130 = vunpack.c.h.b16 %v41
  %v131 = vunpack.c.l.b16 %v42
  %v132 = vunpack.c.h.b16 %v42
  %v133 = vunpack.c.l.b16 %v43
  %v134 = vunpack.c.h.b16 %v43
  %v135 = vunpack.c.l.b16 %v44
  %v136 = vunpack.c.h.b16 %v44
  %v137 = vunpack.c.l.b16 %v45
  %v138 = vunpack.c.h.b16 %v45
  %v139 = vunpack.c.l.b16 %v46
  %v140 = vunpack.c.h.b16 %v46
  %v141 = vunpack.c.l.b16 %v47
  %v142 = vunpack.c.h.b16 %v47
  %v143 = vunpack.c.l.b16 %v48
  %v144 = vunpack.c.h.b16 %v48
  %v145 = vunpack.c.l.b16 %v49
  %v146 = vunpack.c.h.b16 %v49
  %v147 = vunpack.c.l.b16 %v50
  %v148 = vunpack.c.h.b16 %v50
  %v149 = vunpack.c.l.b16 %v51
  %v150 = vunpack.c.h.b16 %v51
  %v151 = vunpack.c.l.b16 %v52
  %v152 = vunpack.c.h.b16 %v52
  %v153 = vunpack.c.l.b16 %v53
  %v154 = vunpack.c.h.b16 %v53
  %v155 = vunpack.c.l.b16 %v54
  %v156 = vunpack.c.h.b16 %v54
  %v157 = vunpack.c.l.b16 %v55
  %v158 = vunpack.c.h.b16 %v55
  %v159 = vunpack.c.l.b16 %v56
  %v160 = vunpack.c.h.b16 %v56
  %v161 = vunpack.c.l.b16 %v57
  %v162 = vunpack.c.h.b16 %v57
  %v163 = vpack.c.b16 %v103, %v99
  %v164 = vpack.c.b16 %v104, %v100
  %v165 = vpack.c.b16 %v105, %v101
  %v166 = vpack.c.b16 %v106, %v102
  %v167 = vpack.c.b16 %v111, %v107
  %v168 = vpack.c.b16 %v112, %v108
  %v169 = vpack.c.b16 %v113, %v109
  %v170 = vpack.c.b16 %v114, %v110
  %v171 = vpack.c.b16 %v119, %v115
  %v172 = vpack.c.b16 %v120, %v116
  %v173 = vpack.c.b16 %v121, %v117
  %v174 = vpack.c.b16 %v122, %v118
  %v175 = vpack.c.b16 %v127, %v123
  %v176 = vpack.c.b16 %v128, %v124
  %v177 = vpack.c.b16 %v129, %v125
  %v178 = vpack.c.b16 %v130, %v126
  %v179 = vpack.c.b16 %v135, %v131
  %v180 = vpack.c.b16 %v136, %v132
  %v181 = vpack.c.b16 %v137, %v133
  %v182 = vpack.c.b16 %v138, %v134
  %v183 = vpack.c.b16 %v143, %v139
  %v184 = vpack.c.b16 %v144, %v140
  %v185 = vpack.c.b16 %v145, %v141
  %v186 = vpack.c.b16 %v146, %v142
  %v187 = vpack.c.b16 %v151, %v147
  %v188 = vpack.c.b16 %v152, %v148
  %v189 = vpack.c.b16 %v153, %v149
  %v190 = vpack.c.b16 %v154, %v150
  %v191 = vpack.c.b16 %v159, %v155
  %v192 = vpack.c.b16 %v160, %v156
  %v193 = vpack.c.b16 %v161, %v157
  %v194 = vpack.c.b16 %v162, %v158
  %227 = vmatprep.subr.bf16.mxu0 %v164
  %228 = vmatpush1.bf16.msra.mxu0 %v163
  %229 = vmatprep.subr.bf16.mxu0 %v168
  %230 = vmatpush1.bf16.msra.mxu0 %v167
  %231 = vmatprep.subr.bf16.mxu0 %v172
  %232 = vmatpush1.bf16.msra.mxu0 %v171
  %233 = vmatprep.subr.bf16.mxu0 %v176
  %234 = vmatpush1.bf16.msra.mxu0 %v175
  %235 = vmatprep.subr.bf16.mxu0 %v180
  %236 = vmatpush1.bf16.msra.mxu0 %v179
  %237 = vmatprep.subr.bf16.mxu0 %v184
  %238 = vmatpush1.bf16.msra.mxu0 %v183
  %239 = vmatprep.subr.bf16.mxu0 %v188
  %240 = vmatpush1.bf16.msra.mxu0 %v187
  %241 = vmatprep.subr.bf16.mxu0 %v192
  %242 = vmatpush1.bf16.msra.mxu0 %v191
  %243 = vmatprep.subr.bf16.mxu0 0
  %244 = vmatpush1.bf16.msra.mxu0 0
  %245 = vmatprep.subr.bf16.mxu0 0
  %246 = vmatpush1.bf16.msra.mxu0 0
  %247 = vmatprep.subr.bf16.mxu0 0
  %248 = vmatpush1.bf16.msra.mxu0 0
  %249 = vmatprep.subr.bf16.mxu0 0
  %250 = vmatpush1.bf16.msra.mxu0 0
  %251 = vmatprep.subr.bf16.mxu0 0
  %252 = vmatpush1.bf16.msra.mxu0 0
  %253 = vmatprep.subr.bf16.mxu0 0
  %254 = vmatpush1.bf16.msra.mxu0 0
  %255 = vmatprep.subr.bf16.mxu0 0
  %256 = vmatpush1.bf16.msra.mxu0 0
  %257 = vmatprep.subr.bf16.mxu0 0
  %258 = vmatpush1.bf16.msra.mxu0 0
  %259 = vmatprep.mubr.bf16.mxu0 0
  %260 = vmatmul.mubr.bf16.gmra.mrb[0].mxu0 %v66
  %v261 = vpop.f32.mrb[0].mxu0
  %v262 = vadd.f32 0.0, %v261
  %v263 = vpop.f32.mrb[0].mxu0
  %v264 = vadd.f32 0.0, %v263
  %v265 = vpop.f32.mrb[0].mxu0
  %v266 = vpop.f32.mrb[0].mxu0
  %267 = vdwg.mxu0
  %268 = vmatprep.subr.bf16.mxu0 %v166
  %269 = vmatpush1.bf16.msra.mxu0 %v165
  %270 = vmatprep.subr.bf16.mxu0 %v170
  %271 = vmatpush1.bf16.msra.mxu0 %v169
  %272 = vmatprep.subr.bf16.mxu0 %v174
  %273 = vmatpush1.bf16.msra.mxu0 %v173
  %274 = vmatprep.subr.bf16.mxu0 %v178
  %275 = vmatpush1.bf16.msra.mxu0 %v177
  %276 = vmatprep.subr.bf16.mxu0 %v182
  %277 = vmatpush1.bf16.msra.mxu0 %v181
  %278 = vmatprep.subr.bf16.mxu0 %v186
  %279 = vmatpush1.bf16.msra.mxu0 %v185
  %280 = vmatprep.subr.bf16.mxu0 %v190
  %281 = vmatpush1.bf16.msra.mxu0 %v189
  %282 = vmatprep.subr.bf16.mxu0 %v194
  %283 = vmatpush1.bf16.msra.mxu0 %v193
  %284 = vmatprep.subr.bf16.mxu0 0
  %285 = vmatpush1.bf16.msra.mxu0 0
  %286 = vmatprep.subr.bf16.mxu0 0
  %287 = vmatpush1.bf16.msra.mxu0 0
  %288 = vmatprep.subr.bf16.mxu0 0
  %289 = vmatpush1.bf16.msra.mxu0 0
  %290 = vmatprep.subr.bf16.mxu0 0
  %291 = vmatpush1.bf16.msra.mxu0 0
  %292 = vmatprep.subr.bf16.mxu0 0
  %293 = vmatpush1.bf16.msra.mxu0 0
  %294 = vmatprep.subr.bf16.mxu0 0
  %295 = vmatpush1.bf16.msra.mxu0 0
  %296 = vmatprep.subr.bf16.mxu0 0
  %297 = vmatpush1.bf16.msra.mxu0 0
  %298 = vmatprep.subr.bf16.mxu0 0
  %299 = vmatpush1.bf16.msra.mxu0 0
  %300 = vmatprep.mubr.bf16.mxu0 0
  %301 = vmatmul.mubr.bf16.gmra.mrb[0].mxu0 %v66
  %v302 = vpop.f32.mrb[0].mxu0
  %v303 = vadd.f32 0.0, %v302
  %v304 = vpop.f32.mrb[0].mxu0
  %v305 = vadd.f32 0.0, %v304
  %v306 = vpop.f32.mrb[0].mxu0
  %v307 = vpop.f32.mrb[0].mxu0
  %308 = vdwg.mxu0
  %v309 = vadd.f32 %v62, %v262
  %v310 = vadd.f32 %v63, %v264
  %v311 = vadd.f32 %v64, %v303
  %v312 = vadd.f32 %v65, %v305
  %v313 = vmul.f32 %v309, 0.5
  %v314 = vtanh.pop %v313
  %v315 = vadd.f32 %v314, 1.0
  %v316 = vmul.f32 %v315, 0.5
  %v317 = vmul.f32 %v310, 0.5
  %v318 = vtanh.pop %v317
  %v319 = vadd.f32 %v318, 1.0
  %v320 = vmul.f32 %v319, 0.5
  %v321 = vtanh.pop %v311
  %v322 = vmul.f32 %v312, 0.5
  %v323 = vtanh.pop %v322
  %v324 = vadd.f32 %v323, 1.0
  %v325 = vmul.f32 %v324, 0.5
  %v326 = vmul.f32 %v320, %v59
  %v327 = vmul.f32 %v316, %v321
  %v328 = vadd.f32 %v326, %v327
  %v329 = vtanh.pop %v328
  %v330 = vmul.f32 %v325, %v329
  %v331 = vpack.c.bf16 %v330, %v330
  %332 = vst [vmem:[%s4] sm:$0xf] %v331
  %s333 = scalar_lea.vmem %s0, 16
  %v334 = vld [vmem:[%s333] sm:$0xff]
  %v335 = vld [vmem:[%s333 + $0x8] sm:$0xff]
  %v336 = vunpack.c.l.bf16 %v334
  %v337 = vunpack.c.h.bf16 %v334
  %v338 = vunpack.c.l.bf16 %v335
  %v339 = vunpack.c.h.bf16 %v335
  %340 = vmatprep.subr.bf16.mxu0 %v164
  %341 = vmatpush1.bf16.msra.mxu0 %v163
  %342 = vmatprep.subr.bf16.mxu0 %v168
  %343 = vmatpush1.bf16.msra.mxu0 %v167
  %344 = vmatprep.subr.bf16.mxu0 %v172
  %345 = vmatpush1.bf16.msra.mxu0 %v171
  %346 = vmatprep.subr.bf16.mxu0 %v176
  %347 = vmatpush1.bf16.msra.mxu0 %v175
  %348 = vmatprep.subr.bf16.mxu0 %v180
  %349 = vmatpush1.bf16.msra.mxu0 %v179
  %350 = vmatprep.subr.bf16.mxu0 %v184
  %351 = vmatpush1.bf16.msra.mxu0 %v183
  %352 = vmatprep.subr.bf16.mxu0 %v188
  %353 = vmatpush1.bf16.msra.mxu0 %v187
  %354 = vmatprep.subr.bf16.mxu0 %v192
  %355 = vmatpush1.bf16.msra.mxu0 %v191
  %356 = vmatprep.subr.bf16.mxu0 0
  %357 = vmatpush1.bf16.msra.mxu0 0
  %358 = vmatprep.subr.bf16.mxu0 0
  %359 = vmatpush1.bf16.msra.mxu0 0
  %360 = vmatprep.subr.bf16.mxu0 0
  %361 = vmatpush1.bf16.msra.mxu0 0
  %362 = vmatprep.subr.bf16.mxu0 0
  %363 = vmatpush1.bf16.msra.mxu0 0
  %364 = vmatprep.subr.bf16.mxu0 0
  %365 = vmatpush1.bf16.msra.mxu0 0
  %366 = vmatprep.subr.bf16.mxu0 0
  %367 = vmatpush1.bf16.msra.mxu0 0
  %368 = vmatprep.subr.bf16.mxu0 0
  %369 = vmatpush1.bf16.msra.mxu0 0
  %370 = vmatprep.subr.bf16.mxu0 0
  %371 = vmatpush1.bf16.msra.mxu0 0
  %372 = vmatprep.mubr.bf16.mxu0 0
  %373 = vmatmul.mubr.bf16.gmra.mrb[0].mxu0 %v331
  %v374 = vpop.f32.mrb[0].mxu0
  %v375 = vadd.f32 0.0, %v374
  %v376 = vpop.f32.mrb[0].mxu0
  %v377 = vadd.f32 0.0, %v376
  %v378 = vpop.f32.mrb[0].mxu0
  %v379 = vpop.f32.mrb[0].mxu0
  %380 = vdwg.mxu0
  %381 = vmatprep.subr.bf16.mxu0 %v166
  %382 = vmatpush1.bf16.msra.mxu0 %v165
  %383 = vmatprep.subr.bf16.mxu0 %v170
  %384 = vmatpush1.bf16.msra.mxu0 %v169
  %385 = vmatprep.subr.bf16.mxu0 %v174
  %386 = vmatpush1.bf16.msra.mxu0 %v173
  %387 = vmatprep.subr.bf16.mxu0 %v178
  %388 = vmatpush1.bf16.msra.mxu0 %v177
  %389 = vmatprep.subr.bf16.mxu0 %v182
  %390 = vmatpush1.bf16.msra.mxu0 %v181
  %391 = vmatprep.subr.bf16.mxu0 %v186
  %392 = vmatpush1.bf16.msra.mxu0 %v185
  %393 = vmatprep.subr.bf16.mxu0 %v190
  %394 = vmatpush1.bf16.msra.mxu0 %v189
  %395 = vmatprep.subr.bf16.mxu0 %v194
  %396 = vmatpush1.bf16.msra.mxu0 %v193
  %397 = vmatprep.subr.bf16.mxu0 0
  %398 = vmatpush1.bf16.msra.mxu0 0
  %399 = vmatprep.subr.bf16.mxu0 0
  %400 = vmatpush1.bf16.msra.mxu0 0
  %401 = vmatprep.subr.bf16.mxu0 0
  %402 = vmatpush1.bf16.msra.mxu0 0
  %403 = vmatprep.subr.bf16.mxu0 0
  %404 = vmatpush1.bf16.msra.mxu0 0
  %405 = vmatprep.subr.bf16.mxu0 0
  %406 = vmatpush1.bf16.msra.mxu0 0
  %407 = vmatprep.subr.bf16.mxu0 0
  %408 = vmatpush1.bf16.msra.mxu0 0
  %409 = vmatprep.subr.bf16.mxu0 0
  %410 = vmatpush1.bf16.msra.mxu0 0
  %411 = vmatprep.subr.bf16.mxu0 0
  %412 = vmatpush1.bf16.msra.mxu0 0
  %413 = vmatprep.mubr.bf16.mxu0 0
  %414 = vmatmul.mubr.bf16.gmra.mrb[0].mxu0 %v331
  %v415 = vpop.f32.mrb[0].mxu0
  %v416 = vadd.f32 0.0, %v415
  %v417 = vpop.f32.mrb[0].mxu0
  %v418 = vadd.f32 0.0, %v417
  %v419 = vpop.f32.mrb[0].mxu0
  %v420 = vpop.f32.mrb[0].mxu0
  %421 = vdwg.mxu0
  %v422 = vadd.f32 %v336, %v375
  %v423 = vadd.f32 %v337, %v377
  %v424 = vadd.f32 %v338, %v416
  %v425 = vadd.f32 %v339, %v418
  %v426 = vmul.f32 %v422, 0.5
  %v427 = vtanh.pop %v426
  %v428 = vadd.f32 %v427, 1.0
  %v429 = vmul.f32 %v428, 0.5
  %v430 = vmul.f32 %v423, 0.5
  %v431 = vtanh.pop %v430
  %v432 = vadd.f32 %v431, 1.0
  %v433 = vmul.f32 %v432, 0.5
  %v434 = vtanh.pop %v424
  %v435 = vmul.f32 %v425, 0.5
  %v436 = vtanh.pop %v435
  %v437 = vadd.f32 %v436, 1.0
  %v438 = vmul.f32 %v437, 0.5
  %v439 = vmul.f32 %v433, %v328
  %v440 = vmul.f32 %v429, %v434
  %v441 = vadd.f32 %v439, %v440
  %v442 = vtanh.pop %v441
  %v443 = vmul.f32 %v438, %v442
  %v444 = vpack.c.bf16 %v443, %v443
  %s445 = scalar_lea.vmem %s4, 4
  %446 = vst [vmem:[%s445] sm:$0xf] %v444
  %s447 = scalar_lea.vmem %s0, 32
  %v448 = vld [vmem:[%s447] sm:$0xff]
  %v449 = vld [vmem:[%s447 + $0x8] sm:$0xff]
  %v450 = vunpack.c.l.bf16 %v448
  %v451 = vunpack.c.h.bf16 %v448
  %v452 = vunpack.c.l.bf16 %v449
  %v453 = vunpack.c.h.bf16 %v449
  %454 = vmatprep.subr.bf16.mxu0 %v164
  %455 = vmatpush1.bf16.msra.mxu0 %v163
  %456 = vmatprep.subr.bf16.mxu0 %v168
  %457 = vmatpush1.bf16.msra.mxu0 %v167
  %458 = vmatprep.subr.bf16.mxu0 %v172
  %459 = vmatpush1.bf16.msra.mxu0 %v171
  %460 = vmatprep.subr.bf16.mxu0 %v176
  %461 = vmatpush1.bf16.msra.mxu0 %v175
  %462 = vmatprep.subr.bf16.mxu0 %v180
  %463 = vmatpush1.bf16.msra.mxu0 %v179
  %464 = vmatprep.subr.bf16.mxu0 %v184
  %465 = vmatpush1.bf16.msra.mxu0 %v183
  %466 = vmatprep.subr.bf16.mxu0 %v188
  %467 = vmatpush1.bf16.msra.mxu0 %v187
  %468 = vmatprep.subr.bf16.mxu0 %v192
  %469 = vmatpush1.bf16.msra.mxu0 %v191
  %470 = vmatprep.subr.bf16.mxu0 0
  %471 = vmatpush1.bf16.msra.mxu0 0
  %472 = vmatprep.subr.bf16.mxu0 0
  %473 = vmatpush1.bf16.msra.mxu0 0
  %474 = vmatprep.subr.bf16.mxu0 0
  %475 = vmatpush1.bf16.msra.mxu0 0
  %476 = vmatprep.subr.bf16.mxu0 0
  %477 = vmatpush1.bf16.msra.mxu0 0
  %478 = vmatprep.subr.bf16.mxu0 0
  %479 = vmatpush1.bf16.msra.mxu0 0
  %480 = vmatprep.subr.bf16.mxu0 0
  %481 = vmatpush1.bf16.msra.mxu0 0
  %482 = vmatprep.subr.bf16.mxu0 0
  %483 = vmatpush1.bf16.msra.mxu0 0
  %484 = vmatprep.subr.bf16.mxu0 0
  %485 = vmatpush1.bf16.msra.mxu0 0
  %486 = vmatprep.mubr.bf16.mxu0 0
  %487 = vmatmul.mubr.bf16.gmra.mrb[0].mxu0 %v444
  %v488 = vpop.f32.mrb[0].mxu0
  %v489 = vadd.f32 0.0, %v488
  %v490 = vpop.f32.mrb[0].mxu0
  %v491 = vadd.f32 0.0, %v490
  %v492 = vpop.f32.mrb[0].mxu0
  %v493 = vpop.f32.mrb[0].mxu0
  %494 = vdwg.mxu0
  %495 = vmatprep.subr.bf16.mxu0 %v166
  %496 = vmatpush1.bf16.msra.mxu0 %v165
  %497 = vmatprep.subr.bf16.mxu0 %v170
  %498 = vmatpush1.bf16.msra.mxu0 %v169
  %499 = vmatprep.subr.bf16.mxu0 %v174
  %500 = vmatpush1.bf16.msra.mxu0 %v173
  %501 = vmatprep.subr.bf16.mxu0 %v178
  %502 = vmatpush1.bf16.msra.mxu0 %v177
  %503 = vmatprep.subr.bf16.mxu0 %v182
  %504 = vmatpush1.bf16.msra.mxu0 %v181
  %505 = vmatprep.subr.bf16.mxu0 %v186
  %506 = vmatpush1.bf16.msra.mxu0 %v185
  %507 = vmatprep.subr.bf16.mxu0 %v190
  %508 = vmatpush1.bf16.msra.mxu0 %v189
  %509 = vmatprep.subr.bf16.mxu0 %v194
  %510 = vmatpush1.bf16.msra.mxu0 %v193
  %511 = vmatprep.subr.bf16.mxu0 0
  %512 = vmatpush1.bf16.msra.mxu0 0
  %513 = vmatprep.subr.bf16.mxu0 0
  %514 = vmatpush1.bf16.msra.mxu0 0
  %515 = vmatprep.subr.bf16.mxu0 0
  %516 = vmatpush1.bf16.msra.mxu0 0
  %517 = vmatprep.subr.bf16.mxu0 0
  %518 = vmatpush1.bf16.msra.mxu0 0
  %519 = vmatprep.subr.bf16.mxu0 0
  %520 = vmatpush1.bf16.msra.mxu0 0
  %521 = vmatprep.subr.bf16.mxu0 0
  %522 = vmatpush1.bf16.msra.mxu0 0
  %523 = vmatprep.subr.bf16.mxu0 0
  %524 = vmatpush1.bf16.msra.mxu0 0
  %525 = vmatprep.subr.bf16.mxu0 0
  %526 = vmatpush1.bf16.msra.mxu0 0
  %527 = vmatprep.mubr.bf16.mxu0 0
  %528 = vmatmul.mubr.bf16.gmra.mrb[0].mxu0 %v444
  %v529 = vpop.f32.mrb[0].mxu0
  %v530 = vadd.f32 0.0, %v529
  %v531 = vpop.f32.mrb[0].mxu0
  %v532 = vadd.f32 0.0, %v531
  %v533 = vpop.f32.mrb[0].mxu0
  %v534 = vpop.f32.mrb[0].mxu0
  %535 = vdwg.mxu0
  %v536 = vadd.f32 %v450, %v489
  %v537 = vadd.f32 %v451, %v491
  %v538 = vadd.f32 %v452, %v530
  %v539 = vadd.f32 %v453, %v532
  %v540 = vmul.f32 %v536, 0.5
  %v541 = vtanh.pop %v540
  %v542 = vadd.f32 %v541, 1.0
  %v543 = vmul.f32 %v542, 0.5
  %v544 = vmul.f32 %v537, 0.5
  %v545 = vtanh.pop %v544
  %v546 = vadd.f32 %v545, 1.0
  %v547 = vmul.f32 %v546, 0.5
  %v548 = vtanh.pop %v538
  %v549 = vmul.f32 %v539, 0.5
  %v550 = vtanh.pop %v549
  %v551 = vadd.f32 %v550, 1.0
  %v552 = vmul.f32 %v551, 0.5
  %v553 = vmul.f32 %v547, %v441
  %v554 = vmul.f32 %v543, %v548
  %v555 = vadd.f32 %v553, %v554
  %v556 = vtanh.pop %v555
  %v557 = vmul.f32 %v552, %v556
  %v558 = vpack.c.bf16 %v557, %v557
  %s559 = scalar_lea.vmem %s4, 8
  %560 = vst [vmem:[%s559] sm:$0xf] %v558
  %s561 = scalar_lea.vmem %s0, 48
  %v562 = vld [vmem:[%s561] sm:$0xff]
  %v563 = vld [vmem:[%s561 + $0x8] sm:$0xff]
  %v564 = vunpack.c.l.bf16 %v562
  %v565 = vunpack.c.h.bf16 %v562
  %v566 = vunpack.c.l.bf16 %v563
  %v567 = vunpack.c.h.bf16 %v563
  %568 = vmatprep.subr.bf16.mxu0 %v164
  %569 = vmatpush1.bf16.msra.mxu0 %v163
  %570 = vmatprep.subr.bf16.mxu0 %v168
  %571 = vmatpush1.bf16.msra.mxu0 %v167
  %572 = vmatprep.subr.bf16.mxu0 %v172
  %573 = vmatpush1.bf16.msra.mxu0 %v171
  %574 = vmatprep.subr.bf16.mxu0 %v176
  %575 = vmatpush1.bf16.msra.mxu0 %v175
  %576 = vmatprep.subr.bf16.mxu0 %v180
  %577 = vmatpush1.bf16.msra.mxu0 %v179
  %578 = vmatprep.subr.bf16.mxu0 %v184
  %579 = vmatpush1.bf16.msra.mxu0 %v183
  %580 = vmatprep.subr.bf16.mxu0 %v188
  %581 = vmatpush1.bf16.msra.mxu0 %v187
  %582 = vmatprep.subr.bf16.mxu0 %v192
  %583 = vmatpush1.bf16.msra.mxu0 %v191
  %584 = vmatprep.subr.bf16.mxu0 0
  %585 = vmatpush1.bf16.msra.mxu0 0
  %586 = vmatprep.subr.bf16.mxu0 0
  %587 = vmatpush1.bf16.msra.mxu0 0
  %588 = vmatprep.subr.bf16.mxu0 0
  %589 = vmatpush1.bf16.msra.mxu0 0
  %590 = vmatprep.subr.bf16.mxu0 0
  %591 = vmatpush1.bf16.msra.mxu0 0
  %592 = vmatprep.subr.bf16.mxu0 0
  %593 = vmatpush1.bf16.msra.mxu0 0
  %594 = vmatprep.subr.bf16.mxu0 0
  %595 = vmatpush1.bf16.msra.mxu0 0
  %596 = vmatprep.subr.bf16.mxu0 0
  %597 = vmatpush1.bf16.msra.mxu0 0
  %598 = vmatprep.subr.bf16.mxu0 0
  %599 = vmatpush1.bf16.msra.mxu0 0
  %600 = vmatprep.mubr.bf16.mxu0 0
  %601 = vmatmul.mubr.bf16.gmra.mrb[0].mxu0 %v558
  %v602 = vpop.f32.mrb[0].mxu0
  %v603 = vadd.f32 0.0, %v602
  %v604 = vpop.f32.mrb[0].mxu0
  %v605 = vadd.f32 0.0, %v604
  %v606 = vpop.f32.mrb[0].mxu0
  %v607 = vpop.f32.mrb[0].mxu0
  %608 = vdwg.mxu0
  %609 = vmatprep.subr.bf16.mxu0 %v166
  %610 = vmatpush1.bf16.msra.mxu0 %v165
  %611 = vmatprep.subr.bf16.mxu0 %v170
  %612 = vmatpush1.bf16.msra.mxu0 %v169
  %613 = vmatprep.subr.bf16.mxu0 %v174
  %614 = vmatpush1.bf16.msra.mxu0 %v173
  %615 = vmatprep.subr.bf16.mxu0 %v178
  %616 = vmatpush1.bf16.msra.mxu0 %v177
  %617 = vmatprep.subr.bf16.mxu0 %v182
  %618 = vmatpush1.bf16.msra.mxu0 %v181
  %619 = vmatprep.subr.bf16.mxu0 %v186
  %620 = vmatpush1.bf16.msra.mxu0 %v185
  %621 = vmatprep.subr.bf16.mxu0 %v190
  %622 = vmatpush1.bf16.msra.mxu0 %v189
  %623 = vmatprep.subr.bf16.mxu0 %v194
  %624 = vmatpush1.bf16.msra.mxu0 %v193
  %625 = vmatprep.subr.bf16.mxu0 0
  %626 = vmatpush1.bf16.msra.mxu0 0
  %627 = vmatprep.subr.bf16.mxu0 0
  %628 = vmatpush1.bf16.msra.mxu0 0
  %629 = vmatprep.subr.bf16.mxu0 0
  %630 = vmatpush1.bf16.msra.mxu0 0
  %631 = vmatprep.subr.bf16.mxu0 0
  %632 = vmatpush1.bf16.msra.mxu0 0
  %633 = vmatprep.subr.bf16.mxu0 0
  %634 = vmatpush1.bf16.msra.mxu0 0
  %635 = vmatprep.subr.bf16.mxu0 0
  %636 = vmatpush1.bf16.msra.mxu0 0
  %637 = vmatprep.subr.bf16.mxu0 0
  %638 = vmatpush1.bf16.msra.mxu0 0
  %639 = vmatprep.subr.bf16.mxu0 0
  %640 = vmatpush1.bf16.msra.mxu0 0
  %641 = vmatprep.mubr.bf16.mxu0 0
  %642 = vmatmul.mubr.bf16.gmra.mrb[0].mxu0 %v558
  %v643 = vpop.f32.mrb[0].mxu0
  %v644 = vadd.f32 0.0, %v643
  %v645 = vpop.f32.mrb[0].mxu0
  %v646 = vadd.f32 0.0, %v645
  %v647 = vpop.f32.mrb[0].mxu0
  %v648 = vpop.f32.mrb[0].mxu0
  %649 = vdwg.mxu0
  %v650 = vadd.f32 %v564, %v603
  %v651 = vadd.f32 %v565, %v605
  %v652 = vadd.f32 %v566, %v644
  %v653 = vadd.f32 %v567, %v646
  %v654 = vmul.f32 %v650, 0.5
  %v655 = vtanh.pop %v654
  %v656 = vadd.f32 %v655, 1.0
  %v657 = vmul.f32 %v656, 0.5
  %v658 = vmul.f32 %v651, 0.5
  %v659 = vtanh.pop %v658
  %v660 = vadd.f32 %v659, 1.0
  %v661 = vmul.f32 %v660, 0.5
  %v662 = vtanh.pop %v652
  %v663 = vmul.f32 %v653, 0.5
  %v664 = vtanh.pop %v663
  %v665 = vadd.f32 %v664, 1.0
  %v666 = vmul.f32 %v665, 0.5
  %v667 = vmul.f32 %v661, %v555
  %v668 = vmul.f32 %v657, %v662
  %v669 = vadd.f32 %v667, %v668
  %v670 = vtanh.pop %v669
  %v671 = vmul.f32 %v666, %v670
  %v672 = vpack.c.bf16 %v671, %v671
  %s673 = scalar_lea.vmem %s4, 12
  %674 = vst [vmem:[%s673] sm:$0xf] %v672
  %s675 = scalar_lea.vmem %s0, 64
  %v676 = vld [vmem:[%s675] sm:$0xff]
  %v677 = vld [vmem:[%s675 + $0x8] sm:$0xff]
  %v678 = vunpack.c.l.bf16 %v676
  %v679 = vunpack.c.h.bf16 %v676
  %v680 = vunpack.c.l.bf16 %v677
  %v681 = vunpack.c.h.bf16 %v677
  %682 = vmatprep.subr.bf16.mxu0 %v164
  %683 = vmatpush1.bf16.msra.mxu0 %v163
  %684 = vmatprep.subr.bf16.mxu0 %v168
  %685 = vmatpush1.bf16.msra.mxu0 %v167
  %686 = vmatprep.subr.bf16.mxu0 %v172
  %687 = vmatpush1.bf16.msra.mxu0 %v171
  %688 = vmatprep.subr.bf16.mxu0 %v176
  %689 = vmatpush1.bf16.msra.mxu0 %v175
  %690 = vmatprep.subr.bf16.mxu0 %v180
  %691 = vmatpush1.bf16.msra.mxu0 %v179
  %692 = vmatprep.subr.bf16.mxu0 %v184
  %693 = vmatpush1.bf16.msra.mxu0 %v183
  %694 = vmatprep.subr.bf16.mxu0 %v188
  %695 = vmatpush1.bf16.msra.mxu0 %v187
  %696 = vmatprep.subr.bf16.mxu0 %v192
  %697 = vmatpush1.bf16.msra.mxu0 %v191
  %698 = vmatprep.subr.bf16.mxu0 0
  %699 = vmatpush1.bf16.msra.mxu0 0
  %700 = vmatprep.subr.bf16.mxu0 0
  %701 = vmatpush1.bf16.msra.mxu0 0
  %702 = vmatprep.subr.bf16.mxu0 0
  %703 = vmatpush1.bf16.msra.mxu0 0
  %704 = vmatprep.subr.bf16.mxu0 0
  %705 = vmatpush1.bf16.msra.mxu0 0
  %706 = vmatprep.subr.bf16.mxu0 0
  %707 = vmatpush1.bf16.msra.mxu0 0
  %708 = vmatprep.subr.bf16.mxu0 0
  %709 = vmatpush1.bf16.msra.mxu0 0
  %710 = vmatprep.subr.bf16.mxu0 0
  %711 = vmatpush1.bf16.msra.mxu0 0
  %712 = vmatprep.subr.bf16.mxu0 0
  %713 = vmatpush1.bf16.msra.mxu0 0
  %714 = vmatprep.mubr.bf16.mxu0 0
  %715 = vmatmul.mubr.bf16.gmra.mrb[0].mxu0 %v672
  %v716 = vpop.f32.mrb[0].mxu0
  %v717 = vadd.f32 0.0, %v716
  %v718 = vpop.f32.mrb[0].mxu0
  %v719 = vadd.f32 0.0, %v718
  %v720 = vpop.f32.mrb[0].mxu0
  %v721 = vpop.f32.mrb[0].mxu0
  %722 = vdwg.mxu0
  %723 = vmatprep.subr.bf16.mxu0 %v166
  %724 = vmatpush1.bf16.msra.mxu0 %v165
  %725 = vmatprep.subr.bf16.mxu0 %v170
  %726 = vmatpush1.bf16.msra.mxu0 %v169
  %727 = vmatprep.subr.bf16.mxu0 %v174
  %728 = vmatpush1.bf16.msra.mxu0 %v173
  %729 = vmatprep.subr.bf16.mxu0 %v178
  %730 = vmatpush1.bf16.msra.mxu0 %v177
  %731 = vmatprep.subr.bf16.mxu0 %v182
  %732 = vmatpush1.bf16.msra.mxu0 %v181
  %733 = vmatprep.subr.bf16.mxu0 %v186
  %734 = vmatpush1.bf16.msra.mxu0 %v185
  %735 = vmatprep.subr.bf16.mxu0 %v190
  %736 = vmatpush1.bf16.msra.mxu0 %v189
  %737 = vmatprep.subr.bf16.mxu0 %v194
  %738 = vmatpush1.bf16.msra.mxu0 %v193
  %739 = vmatprep.subr.bf16.mxu0 0
  %740 = vmatpush1.bf16.msra.mxu0 0
  %741 = vmatprep.subr.bf16.mxu0 0
  %742 = vmatpush1.bf16.msra.mxu0 0
  %743 = vmatprep.subr.bf16.mxu0 0
  %744 = vmatpush1.bf16.msra.mxu0 0
  %745 = vmatprep.subr.bf16.mxu0 0
  %746 = vmatpush1.bf16.msra.mxu0 0
  %747 = vmatprep.subr.bf16.mxu0 0
  %748 = vmatpush1.bf16.msra.mxu0 0
  %749 = vmatprep.subr.bf16.mxu0 0
  %750 = vmatpush1.bf16.msra.mxu0 0
  %751 = vmatprep.subr.bf16.mxu0 0
  %752 = vmatpush1.bf16.msra.mxu0 0
  %753 = vmatprep.subr.bf16.mxu0 0
  %754 = vmatpush1.bf16.msra.mxu0 0
  %755 = vmatprep.mubr.bf16.mxu0 0
  %756 = vmatmul.mubr.bf16.gmra.mrb[0].mxu0 %v672
  %v757 = vpop.f32.mrb[0].mxu0
  %v758 = vadd.f32 0.0, %v757
  %v759 = vpop.f32.mrb[0].mxu0
  %v760 = vadd.f32 0.0, %v759
  %v761 = vpop.f32.mrb[0].mxu0
  %v762 = vpop.f32.mrb[0].mxu0
  %763 = vdwg.mxu0
  %v764 = vadd.f32 %v678, %v717
  %v765 = vadd.f32 %v679, %v719
  %v766 = vadd.f32 %v680, %v758
  %v767 = vadd.f32 %v681, %v760
  %v768 = vmul.f32 %v764, 0.5
  %v769 = vtanh.pop %v768
  %v770 = vadd.f32 %v769, 1.0
  %v771 = vmul.f32 %v770, 0.5
  %v772 = vmul.f32 %v765, 0.5
  %v773 = vtanh.pop %v772
  %v774 = vadd.f32 %v773, 1.0
  %v775 = vmul.f32 %v774, 0.5
  %v776 = vtanh.pop %v766
  %v777 = vmul.f32 %v767, 0.5
  %v778 = vtanh.pop %v777
  %v779 = vadd.f32 %v778, 1.0
  %v780 = vmul.f32 %v779, 0.5
  %v781 = vmul.f32 %v775, %v669
  %v782 = vmul.f32 %v771, %v776
  %v783 = vadd.f32 %v781, %v782
  %v784 = vtanh.pop %v783
  %v785 = vmul.f32 %v780, %v784
  %v786 = vpack.c.bf16 %v785, %v785
  %s787 = scalar_lea.vmem %s4, 16
  %788 = vst [vmem:[%s787] sm:$0xf] %v786
  %s789 = scalar_lea.vmem %s0, 80
  %v790 = vld [vmem:[%s789] sm:$0xff]
  %v791 = vld [vmem:[%s789 + $0x8] sm:$0xff]
  %v792 = vunpack.c.l.bf16 %v790
  %v793 = vunpack.c.h.bf16 %v790
  %v794 = vunpack.c.l.bf16 %v791
  %v795 = vunpack.c.h.bf16 %v791
  %796 = vmatprep.subr.bf16.mxu0 %v164
  %797 = vmatpush1.bf16.msra.mxu0 %v163
  %798 = vmatprep.subr.bf16.mxu0 %v168
  %799 = vmatpush1.bf16.msra.mxu0 %v167
  %800 = vmatprep.subr.bf16.mxu0 %v172
  %801 = vmatpush1.bf16.msra.mxu0 %v171
  %802 = vmatprep.subr.bf16.mxu0 %v176
  %803 = vmatpush1.bf16.msra.mxu0 %v175
  %804 = vmatprep.subr.bf16.mxu0 %v180
  %805 = vmatpush1.bf16.msra.mxu0 %v179
  %806 = vmatprep.subr.bf16.mxu0 %v184
  %807 = vmatpush1.bf16.msra.mxu0 %v183
  %808 = vmatprep.subr.bf16.mxu0 %v188
  %809 = vmatpush1.bf16.msra.mxu0 %v187
  %810 = vmatprep.subr.bf16.mxu0 %v192
  %811 = vmatpush1.bf16.msra.mxu0 %v191
  %812 = vmatprep.subr.bf16.mxu0 0
  %813 = vmatpush1.bf16.msra.mxu0 0
  %814 = vmatprep.subr.bf16.mxu0 0
  %815 = vmatpush1.bf16.msra.mxu0 0
  %816 = vmatprep.subr.bf16.mxu0 0
  %817 = vmatpush1.bf16.msra.mxu0 0
  %818 = vmatprep.subr.bf16.mxu0 0
  %819 = vmatpush1.bf16.msra.mxu0 0
  %820 = vmatprep.subr.bf16.mxu0 0
  %821 = vmatpush1.bf16.msra.mxu0 0
  %822 = vmatprep.subr.bf16.mxu0 0
  %823 = vmatpush1.bf16.msra.mxu0 0
  %824 = vmatprep.subr.bf16.mxu0 0
  %825 = vmatpush1.bf16.msra.mxu0 0
  %826 = vmatprep.subr.bf16.mxu0 0
  %827 = vmatpush1.bf16.msra.mxu0 0
  %828 = vmatprep.mubr.bf16.mxu0 0
  %829 = vmatmul.mubr.bf16.gmra.mrb[0].mxu0 %v786
  %v830 = vpop.f32.mrb[0].mxu0
  %v831 = vadd.f32 0.0, %v830
  %v832 = vpop.f32.mrb[0].mxu0
  %v833 = vadd.f32 0.0, %v832
  %v834 = vpop.f32.mrb[0].mxu0
  %v835 = vpop.f32.mrb[0].mxu0
  %836 = vdwg.mxu0
  %837 = vmatprep.subr.bf16.mxu0 %v166
  %838 = vmatpush1.bf16.msra.mxu0 %v165
  %839 = vmatprep.subr.bf16.mxu0 %v170
  %840 = vmatpush1.bf16.msra.mxu0 %v169
  %841 = vmatprep.subr.bf16.mxu0 %v174
  %842 = vmatpush1.bf16.msra.mxu0 %v173
  %843 = vmatprep.subr.bf16.mxu0 %v178
  %844 = vmatpush1.bf16.msra.mxu0 %v177
  %845 = vmatprep.subr.bf16.mxu0 %v182
  %846 = vmatpush1.bf16.msra.mxu0 %v181
  %847 = vmatprep.subr.bf16.mxu0 %v186
  %848 = vmatpush1.bf16.msra.mxu0 %v185
  %849 = vmatprep.subr.bf16.mxu0 %v190
  %850 = vmatpush1.bf16.msra.mxu0 %v189
  %851 = vmatprep.subr.bf16.mxu0 %v194
  %852 = vmatpush1.bf16.msra.mxu0 %v193
  %853 = vmatprep.subr.bf16.mxu0 0
  %854 = vmatpush1.bf16.msra.mxu0 0
  %855 = vmatprep.subr.bf16.mxu0 0
  %856 = vmatpush1.bf16.msra.mxu0 0
  %857 = vmatprep.subr.bf16.mxu0 0
  %858 = vmatpush1.bf16.msra.mxu0 0
  %859 = vmatprep.subr.bf16.mxu0 0
  %860 = vmatpush1.bf16.msra.mxu0 0
  %861 = vmatprep.subr.bf16.mxu0 0
  %862 = vmatpush1.bf16.msra.mxu0 0
  %863 = vmatprep.subr.bf16.mxu0 0
  %864 = vmatpush1.bf16.msra.mxu0 0
  %865 = vmatprep.subr.bf16.mxu0 0
  %866 = vmatpush1.bf16.msra.mxu0 0
  %867 = vmatprep.subr.bf16.mxu0 0
  %868 = vmatpush1.bf16.msra.mxu0 0
  %869 = vmatprep.mubr.bf16.mxu0 0
  %870 = vmatmul.mubr.bf16.gmra.mrb[0].mxu0 %v786
  %v871 = vpop.f32.mrb[0].mxu0
  %v872 = vadd.f32 0.0, %v871
  %v873 = vpop.f32.mrb[0].mxu0
  %v874 = vadd.f32 0.0, %v873
  %v875 = vpop.f32.mrb[0].mxu0
  %v876 = vpop.f32.mrb[0].mxu0
  %877 = vdwg.mxu0
  %v878 = vadd.f32 %v792, %v831
  %v879 = vadd.f32 %v793, %v833
  %v880 = vadd.f32 %v794, %v872
  %v881 = vadd.f32 %v795, %v874
  %v882 = vmul.f32 %v878, 0.5
  %v883 = vtanh.pop %v882
  %v884 = vadd.f32 %v883, 1.0
  %v885 = vmul.f32 %v884, 0.5
  %v886 = vmul.f32 %v879, 0.5
  %v887 = vtanh.pop %v886
  %v888 = vadd.f32 %v887, 1.0
  %v889 = vmul.f32 %v888, 0.5
  %v890 = vtanh.pop %v880
  %v891 = vmul.f32 %v881, 0.5
  %v892 = vtanh.pop %v891
  %v893 = vadd.f32 %v892, 1.0
  %v894 = vmul.f32 %v893, 0.5
  %v895 = vmul.f32 %v889, %v783
  %v896 = vmul.f32 %v885, %v890
  %v897 = vadd.f32 %v895, %v896
  %v898 = vtanh.pop %v897
  %v899 = vmul.f32 %v894, %v898
  %v900 = vpack.c.bf16 %v899, %v899
  %s901 = scalar_lea.vmem %s4, 20
  %902 = vst [vmem:[%s901] sm:$0xf] %v900
  %s903 = scalar_lea.vmem %s0, 96
  %v904 = vld [vmem:[%s903] sm:$0xff]
  %v905 = vld [vmem:[%s903 + $0x8] sm:$0xff]
  %v906 = vunpack.c.l.bf16 %v904
  %v907 = vunpack.c.h.bf16 %v904
  %v908 = vunpack.c.l.bf16 %v905
  %v909 = vunpack.c.h.bf16 %v905
  %910 = vmatprep.subr.bf16.mxu0 %v164
  %911 = vmatpush1.bf16.msra.mxu0 %v163
  %912 = vmatprep.subr.bf16.mxu0 %v168
  %913 = vmatpush1.bf16.msra.mxu0 %v167
  %914 = vmatprep.subr.bf16.mxu0 %v172
  %915 = vmatpush1.bf16.msra.mxu0 %v171
  %916 = vmatprep.subr.bf16.mxu0 %v176
  %917 = vmatpush1.bf16.msra.mxu0 %v175
  %918 = vmatprep.subr.bf16.mxu0 %v180
  %919 = vmatpush1.bf16.msra.mxu0 %v179
  %920 = vmatprep.subr.bf16.mxu0 %v184
  %921 = vmatpush1.bf16.msra.mxu0 %v183
  %922 = vmatprep.subr.bf16.mxu0 %v188
  %923 = vmatpush1.bf16.msra.mxu0 %v187
  %924 = vmatprep.subr.bf16.mxu0 %v192
  %925 = vmatpush1.bf16.msra.mxu0 %v191
  %926 = vmatprep.subr.bf16.mxu0 0
  %927 = vmatpush1.bf16.msra.mxu0 0
  %928 = vmatprep.subr.bf16.mxu0 0
  %929 = vmatpush1.bf16.msra.mxu0 0
  %930 = vmatprep.subr.bf16.mxu0 0
  %931 = vmatpush1.bf16.msra.mxu0 0
  %932 = vmatprep.subr.bf16.mxu0 0
  %933 = vmatpush1.bf16.msra.mxu0 0
  %934 = vmatprep.subr.bf16.mxu0 0
  %935 = vmatpush1.bf16.msra.mxu0 0
  %936 = vmatprep.subr.bf16.mxu0 0
  %937 = vmatpush1.bf16.msra.mxu0 0
  %938 = vmatprep.subr.bf16.mxu0 0
  %939 = vmatpush1.bf16.msra.mxu0 0
  %940 = vmatprep.subr.bf16.mxu0 0
  %941 = vmatpush1.bf16.msra.mxu0 0
  %942 = vmatprep.mubr.bf16.mxu0 0
  %943 = vmatmul.mubr.bf16.gmra.mrb[0].mxu0 %v900
  %v944 = vpop.f32.mrb[0].mxu0
  %v945 = vadd.f32 0.0, %v944
  %v946 = vpop.f32.mrb[0].mxu0
  %v947 = vadd.f32 0.0, %v946
  %v948 = vpop.f32.mrb[0].mxu0
  %v949 = vpop.f32.mrb[0].mxu0
  %950 = vdwg.mxu0
  %951 = vmatprep.subr.bf16.mxu0 %v166
  %952 = vmatpush1.bf16.msra.mxu0 %v165
  %953 = vmatprep.subr.bf16.mxu0 %v170
  %954 = vmatpush1.bf16.msra.mxu0 %v169
  %955 = vmatprep.subr.bf16.mxu0 %v174
  %956 = vmatpush1.bf16.msra.mxu0 %v173
  %957 = vmatprep.subr.bf16.mxu0 %v178
  %958 = vmatpush1.bf16.msra.mxu0 %v177
  %959 = vmatprep.subr.bf16.mxu0 %v182
  %960 = vmatpush1.bf16.msra.mxu0 %v181
  %961 = vmatprep.subr.bf16.mxu0 %v186
  %962 = vmatpush1.bf16.msra.mxu0 %v185
  %963 = vmatprep.subr.bf16.mxu0 %v190
  %964 = vmatpush1.bf16.msra.mxu0 %v189
  %965 = vmatprep.subr.bf16.mxu0 %v194
  %966 = vmatpush1.bf16.msra.mxu0 %v193
  %967 = vmatprep.subr.bf16.mxu0 0
  %968 = vmatpush1.bf16.msra.mxu0 0
  %969 = vmatprep.subr.bf16.mxu0 0
  %970 = vmatpush1.bf16.msra.mxu0 0
  %971 = vmatprep.subr.bf16.mxu0 0
  %972 = vmatpush1.bf16.msra.mxu0 0
  %973 = vmatprep.subr.bf16.mxu0 0
  %974 = vmatpush1.bf16.msra.mxu0 0
  %975 = vmatprep.subr.bf16.mxu0 0
  %976 = vmatpush1.bf16.msra.mxu0 0
  %977 = vmatprep.subr.bf16.mxu0 0
  %978 = vmatpush1.bf16.msra.mxu0 0
  %979 = vmatprep.subr.bf16.mxu0 0
  %980 = vmatpush1.bf16.msra.mxu0 0
  %981 = vmatprep.subr.bf16.mxu0 0
  %982 = vmatpush1.bf16.msra.mxu0 0
  %983 = vmatprep.mubr.bf16.mxu0 0
  %984 = vmatmul.mubr.bf16.gmra.mrb[0].mxu0 %v900
  %v985 = vpop.f32.mrb[0].mxu0
  %v986 = vadd.f32 0.0, %v985
  %v987 = vpop.f32.mrb[0].mxu0
  %v988 = vadd.f32 0.0, %v987
  %v989 = vpop.f32.mrb[0].mxu0
  %v990 = vpop.f32.mrb[0].mxu0
  %991 = vdwg.mxu0
  %v992 = vadd.f32 %v906, %v945
  %v993 = vadd.f32 %v907, %v947
  %v994 = vadd.f32 %v908, %v986
  %v995 = vadd.f32 %v909, %v988
  %v996 = vmul.f32 %v992, 0.5
  %v997 = vtanh.pop %v996
  %v998 = vadd.f32 %v997, 1.0
  %v999 = vmul.f32 %v998, 0.5
  %v1000 = vmul.f32 %v993, 0.5
  %v1001 = vtanh.pop %v1000
  %v1002 = vadd.f32 %v1001, 1.0
  %v1003 = vmul.f32 %v1002, 0.5
  %v1004 = vtanh.pop %v994
  %v1005 = vmul.f32 %v995, 0.5
  %v1006 = vtanh.pop %v1005
  %v1007 = vadd.f32 %v1006, 1.0
  %v1008 = vmul.f32 %v1007, 0.5
  %v1009 = vmul.f32 %v1003, %v897
  %v1010 = vmul.f32 %v999, %v1004
  %v1011 = vadd.f32 %v1009, %v1010
  %v1012 = vtanh.pop %v1011
  %v1013 = vmul.f32 %v1008, %v1012
  %v1014 = vpack.c.bf16 %v1013, %v1013
  %s1015 = scalar_lea.vmem %s4, 24
  %1016 = vst [vmem:[%s1015] sm:$0xf] %v1014
  %s1017 = scalar_lea.vmem %s0, 112
  %v1018 = vld [vmem:[%s1017] sm:$0xff]
  %v1019 = vld [vmem:[%s1017 + $0x8] sm:$0xff]
  %v1020 = vunpack.c.l.bf16 %v1018
  %v1021 = vunpack.c.h.bf16 %v1018
  %v1022 = vunpack.c.l.bf16 %v1019
  %v1023 = vunpack.c.h.bf16 %v1019
  %1024 = vmatprep.subr.bf16.mxu0 %v164
  %1025 = vmatpush1.bf16.msra.mxu0 %v163
  %1026 = vmatprep.subr.bf16.mxu0 %v168
  %1027 = vmatpush1.bf16.msra.mxu0 %v167
  %1028 = vmatprep.subr.bf16.mxu0 %v172
  %1029 = vmatpush1.bf16.msra.mxu0 %v171
  %1030 = vmatprep.subr.bf16.mxu0 %v176
  %1031 = vmatpush1.bf16.msra.mxu0 %v175
  %1032 = vmatprep.subr.bf16.mxu0 %v180
  %1033 = vmatpush1.bf16.msra.mxu0 %v179
  %1034 = vmatprep.subr.bf16.mxu0 %v184
  %1035 = vmatpush1.bf16.msra.mxu0 %v183
  %1036 = vmatprep.subr.bf16.mxu0 %v188
  %1037 = vmatpush1.bf16.msra.mxu0 %v187
  %1038 = vmatprep.subr.bf16.mxu0 %v192
  %1039 = vmatpush1.bf16.msra.mxu0 %v191
  %1040 = vmatprep.subr.bf16.mxu0 0
  %1041 = vmatpush1.bf16.msra.mxu0 0
  %1042 = vmatprep.subr.bf16.mxu0 0
  %1043 = vmatpush1.bf16.msra.mxu0 0
  %1044 = vmatprep.subr.bf16.mxu0 0
  %1045 = vmatpush1.bf16.msra.mxu0 0
  %1046 = vmatprep.subr.bf16.mxu0 0
  %1047 = vmatpush1.bf16.msra.mxu0 0
  %1048 = vmatprep.subr.bf16.mxu0 0
  %1049 = vmatpush1.bf16.msra.mxu0 0
  %1050 = vmatprep.subr.bf16.mxu0 0
  %1051 = vmatpush1.bf16.msra.mxu0 0
  %1052 = vmatprep.subr.bf16.mxu0 0
  %1053 = vmatpush1.bf16.msra.mxu0 0
  %1054 = vmatprep.subr.bf16.mxu0 0
  %1055 = vmatpush1.bf16.msra.mxu0 0
  %1056 = vmatprep.mubr.bf16.mxu0 0
  %1057 = vmatmul.mubr.bf16.gmra.mrb[0].mxu0 %v1014
  %v1058 = vpop.f32.mrb[0].mxu0
  %v1059 = vadd.f32 0.0, %v1058
  %v1060 = vpop.f32.mrb[0].mxu0
  %v1061 = vadd.f32 0.0, %v1060
  %v1062 = vpop.f32.mrb[0].mxu0
  %v1063 = vpop.f32.mrb[0].mxu0
  %1064 = vdwg.mxu0
  %1065 = vmatprep.subr.bf16.mxu0 %v166
  %1066 = vmatpush1.bf16.msra.mxu0 %v165
  %1067 = vmatprep.subr.bf16.mxu0 %v170
  %1068 = vmatpush1.bf16.msra.mxu0 %v169
  %1069 = vmatprep.subr.bf16.mxu0 %v174
  %1070 = vmatpush1.bf16.msra.mxu0 %v173
  %1071 = vmatprep.subr.bf16.mxu0 %v178
  %1072 = vmatpush1.bf16.msra.mxu0 %v177
  %1073 = vmatprep.subr.bf16.mxu0 %v182
  %1074 = vmatpush1.bf16.msra.mxu0 %v181
  %1075 = vmatprep.subr.bf16.mxu0 %v186
  %1076 = vmatpush1.bf16.msra.mxu0 %v185
  %1077 = vmatprep.subr.bf16.mxu0 %v190
  %1078 = vmatpush1.bf16.msra.mxu0 %v189
  %1079 = vmatprep.subr.bf16.mxu0 %v194
  %1080 = vmatpush1.bf16.msra.mxu0 %v193
  %1081 = vmatprep.subr.bf16.mxu0 0
  %1082 = vmatpush1.bf16.msra.mxu0 0
  %1083 = vmatprep.subr.bf16.mxu0 0
  %1084 = vmatpush1.bf16.msra.mxu0 0
  %1085 = vmatprep.subr.bf16.mxu0 0
  %1086 = vmatpush1.bf16.msra.mxu0 0
  %1087 = vmatprep.subr.bf16.mxu0 0
  %1088 = vmatpush1.bf16.msra.mxu0 0
  %1089 = vmatprep.subr.bf16.mxu0 0
  %1090 = vmatpush1.bf16.msra.mxu0 0
  %1091 = vmatprep.subr.bf16.mxu0 0
  %1092 = vmatpush1.bf16.msra.mxu0 0
  %1093 = vmatprep.subr.bf16.mxu0 0
  %1094 = vmatpush1.bf16.msra.mxu0 0
  %1095 = vmatprep.subr.bf16.mxu0 0
  %1096 = vmatpush1.bf16.msra.mxu0 0
  %1097 = vmatprep.mubr.bf16.mxu0 0
  %1098 = vmatmul.mubr.bf16.gmra.mrb[0].mxu0 %v1014
  %v1099 = vpop.f32.mrb[0].mxu0
  %v1100 = vadd.f32 0.0, %v1099
  %v1101 = vpop.f32.mrb[0].mxu0
  %v1102 = vadd.f32 0.0, %v1101
  %v1103 = vpop.f32.mrb[0].mxu0
  %v1104 = vpop.f32.mrb[0].mxu0
  %1105 = vdwg.mxu0
  %v1106 = vadd.f32 %v1020, %v1059
  %v1107 = vadd.f32 %v1021, %v1061
  %v1108 = vadd.f32 %v1022, %v1100
  %v1109 = vadd.f32 %v1023, %v1102
  %v1110 = vmul.f32 %v1106, 0.5
  %v1111 = vtanh.pop %v1110
  %v1112 = vadd.f32 %v1111, 1.0
  %v1113 = vmul.f32 %v1112, 0.5
  %v1114 = vmul.f32 %v1107, 0.5
  %v1115 = vtanh.pop %v1114
  %v1116 = vadd.f32 %v1115, 1.0
  %v1117 = vmul.f32 %v1116, 0.5
  %v1118 = vtanh.pop %v1108
  %v1119 = vmul.f32 %v1109, 0.5
  %v1120 = vtanh.pop %v1119
  %v1121 = vadd.f32 %v1120, 1.0
  %v1122 = vmul.f32 %v1121, 0.5
  %v1123 = vmul.f32 %v1117, %v1011
  %v1124 = vmul.f32 %v1113, %v1118
  %v1125 = vadd.f32 %v1123, %v1124
  %v1126 = vtanh.pop %v1125
  %v1127 = vmul.f32 %v1122, %v1126
  %v1128 = vpack.c.bf16 %v1127, %v1127
  %s1129 = scalar_lea.vmem %s4, 28
  %1130 = vst [vmem:[%s1129] sm:$0xf] %v1128
  %1131 = vst [vmem:[#allocation2] sm:$0xff] %v1127
  %1132 = vst [vmem:[#allocation3] sm:$0xff] %v1125
  // Predicated region
  $region22: #{lstm_generator_forward.4} parent=0 // pred_check
    _
  $region23: #{lstm_generator_forward.4} parent=0 // pred_check_branch
    %1134 = sbr.rel (0) target = $region25
  $region24: #{lstm_generator_forward.4} parent=0 // pred_region
    _
  $region25: #{lstm_generator_forward.4} parent=0 // pred_fallthru
    _
  // Predicated region
  $region26: #{lstm_generator_forward.4} parent=0 // pred_check
    _
  $region27: #{lstm_generator_forward.4} parent=0 // pred_check_branch
    %1136 = sbr.rel (0) target = $region29
  $region28: #{lstm_generator_forward.4} parent=0 // pred_region
    _
  $region29: #{lstm_generator_forward.4} parent=0 // pred_fallthru
    _

// kernel: lstm_generator_forward.5
$region0: #{lstm_generator_forward.5}
  #allocation0 [shape = 'u32[]', space=smem, size = 0x4, offset = 0x4, fixed_abs, tag = 'smem constant byte address 0x4 - core index']
  #allocation1 [shape = 'u32[144,128]{1,0:T(1,128)}', space=vmem, size = 0x12000, scoped, tag = 'internal scratch']
  #allocation2 [shape = 'f32[16,1]{1,0:T(8,128)}', space=vmem, size = 0x2000, scoped, tag = 'scratch operand']
  #allocation3 [shape = 'f32[16,1]{1,0:T(8,128)}', space=vmem, size = 0x2000, scoped, tag = 'scratch operand']
  %s0 = inlined_call_operand.vmem [shape: bf16[16,128], index: 0, kind: input, shape index: {}]
  %s1 = inlined_call_operand.vmem [shape: bf16[128,128], index: 1, kind: input, shape index: {}]
  %s2 = inlined_call_operand.vmem [shape: f32[1,128], index: 2, kind: input, shape index: {}]
  %s3 = inlined_call_operand.vmem [shape: f32[16,128], index: 3, kind: output, shape index: {0}]
  %s4 = inlined_call_operand.vmem [shape: f32[16,1], index: 4, kind: output, shape index: {1}]
  %5 = xla_tuple %s3, %s4
  %s6 = sld [smem:[#allocation0]]
  $region38: #{lstm_generator_forward.5} parent=0
    _
  %s8 = ssub.s32 1, %s6
  %s9 = scalar_select 0, %s8, %s6
  // Predicated region
  $region2: #{lstm_generator_forward.5} parent=0 // pred_check
    _
  $region3: #{lstm_generator_forward.5} parent=0 // pred_check_branch
    %11 = sbr.rel (0) target = $region5
  $region4: #{lstm_generator_forward.5} parent=0 // pred_region
    _
  $region5: #{lstm_generator_forward.5} parent=0 // pred_fallthru
    _
  // Predicated region
  $region6: #{lstm_generator_forward.5} parent=0 // pred_check
    _
  $region7: #{lstm_generator_forward.5} parent=0 // pred_check_branch
    %13 = sbr.rel (0) target = $region9
  $region8: #{lstm_generator_forward.5} parent=0 // pred_region
    _
  $region9: #{lstm_generator_forward.5} parent=0 // pred_fallthru
    _
  // Predicated region
  $region10: #{lstm_generator_forward.5} parent=0 // pred_check
    _
  $region11: #{lstm_generator_forward.5} parent=0 // pred_check_branch
    %15 = sbr.rel (0) target = $region13
  $region12: #{lstm_generator_forward.5} parent=0 // pred_region
    _
  $region13: #{lstm_generator_forward.5} parent=0 // pred_fallthru
    _
  %p17 = scmp.eq.s32.totalorder 0, 0
  // Predicated region
  $region14: #{lstm_generator_forward.5} parent=0 // pred_check
    %p18 = pneg %p17
  $region15: #{lstm_generator_forward.5} parent=0 // pred_check_branch
    %20 = sbr.rel (%p18) target = $region17
  $region16: #{lstm_generator_forward.5} parent=0 // pred_region
    %vm21 = vcmask 7168
    %22 = vst.msk [vmem:[#allocation2] sm:$0xff] %vm21, -inf
    %23 = vst.msk [vmem:[#allocation2 + $0x8] sm:$0xff] %vm21, -inf
    %24 = vst.msk [vmem:[#allocation3] sm:$0xff] %vm21, 0.0
    %25 = vst.msk [vmem:[#allocation3 + $0x8] sm:$0xff] %vm21, 0.0
  $region17: #{lstm_generator_forward.5} parent=0 // pred_fallthru
    _
  %v26 = vld [vmem:[%s0] sm:$0xf]
  %v27 = vld [vmem:[%s0 + $0x4] sm:$0xf]
  %v28 = vld [vmem:[%s1] sm:$0xf]
  %v29 = vld [vmem:[%s1 + $0x4] sm:$0xf]
  %v30 = vld [vmem:[%s1 + $0x8] sm:$0xf]
  %v31 = vld [vmem:[%s1 + $0xc] sm:$0xf]
  %v32 = vld [vmem:[%s1 + $0x10] sm:$0xf]
  %v33 = vld [vmem:[%s1 + $0x14] sm:$0xf]
  %v34 = vld [vmem:[%s1 + $0x18] sm:$0xf]
  %v35 = vld [vmem:[%s1 + $0x1c] sm:$0xf]
  %v36 = vld [vmem:[%s1 + $0x20] sm:$0xf]
  %v37 = vld [vmem:[%s1 + $0x24] sm:$0xf]
  %v38 = vld [vmem:[%s1 + $0x28] sm:$0xf]
  %v39 = vld [vmem:[%s1 + $0x2c] sm:$0xf]
  %v40 = vld [vmem:[%s1 + $0x30] sm:$0xf]
  %v41 = vld [vmem:[%s1 + $0x34] sm:$0xf]
  %v42 = vld [vmem:[%s1 + $0x38] sm:$0xf]
  %v43 = vld [vmem:[%s1 + $0x3c] sm:$0xf]
  %v44 = vld [vmem:[%s2] sm:$0x1]
  %v46 = vlaneseq
  %v47 = vshrl.u32 %v46, 7
  %v48 = vsub.s32 0, %v47
  %v49 = vrot.slane %v44, %v48
  %v53 = vunpack.c.l.b16 %v26
  %v54 = vunpack.c.l.b16 %v27
  %v55 = vpack.c.b16 %v54, %v53
  %v73 = vunpack.c.l.b16 %v28
  %v74 = vunpack.c.l.b16 %v29
  %v75 = vunpack.c.l.b16 %v30
  %v76 = vunpack.c.l.b16 %v31
  %v77 = vunpack.c.l.b16 %v32
  %v78 = vunpack.c.l.b16 %v33
  %v79 = vunpack.c.l.b16 %v34
  %v80 = vunpack.c.l.b16 %v35
  %v81 = vunpack.c.l.b16 %v36
  %v82 = vunpack.c.l.b16 %v37
  %v83 = vunpack.c.l.b16 %v38
  %v84 = vunpack.c.l.b16 %v39
  %v85 = vunpack.c.l.b16 %v40
  %v86 = vunpack.c.l.b16 %v41
  %v87 = vunpack.c.l.b16 %v42
  %v88 = vunpack.c.l.b16 %v43
  %v89 = vpack.c.b16 %v74, %v73
  %v90 = vpack.c.b16 %v76, %v75
  %v91 = vpack.c.b16 %v78, %v77
  %v92 = vpack.c.b16 %v80, %v79
  %v93 = vpack.c.b16 %v82, %v81
  %v94 = vpack.c.b16 %v84, %v83
  %v95 = vpack.c.b16 %v86, %v85
  %v96 = vpack.c.b16 %v88, %v87
  %105 = vmatprep.subr.bf16.mxu0 0
  %106 = vmatpush1.bf16.msra.mxu0 %v89
  %107 = vmatprep.subr.bf16.mxu0 0
  %108 = vmatpush1.bf16.msra.mxu0 %v90
  %109 = vmatprep.subr.bf16.mxu0 0
  %110 = vmatpush1.bf16.msra.mxu0 %v91
  %111 = vmatprep.subr.bf16.mxu0 0
  %112 = vmatpush1.bf16.msra.mxu0 %v92
  %113 = vmatprep.subr.bf16.mxu0 0
  %114 = vmatpush1.bf16.msra.mxu0 %v93
  %115 = vmatprep.subr.bf16.mxu0 0
  %116 = vmatpush1.bf16.msra.mxu0 %v94
  %117 = vmatprep.subr.bf16.mxu0 0
  %118 = vmatpush1.bf16.msra.mxu0 %v95
  %119 = vmatprep.subr.bf16.mxu0 0
  %120 = vmatpush1.bf16.msra.mxu0 %v96
  %121 = vmatprep.subr.bf16.mxu0 0
  %122 = vmatpush1.bf16.msra.mxu0 0
  %123 = vmatprep.subr.bf16.mxu0 0
  %124 = vmatpush1.bf16.msra.mxu0 0
  %125 = vmatprep.subr.bf16.mxu0 0
  %126 = vmatpush1.bf16.msra.mxu0 0
  %127 = vmatprep.subr.bf16.mxu0 0
  %128 = vmatpush1.bf16.msra.mxu0 0
  %129 = vmatprep.subr.bf16.mxu0 0
  %130 = vmatpush1.bf16.msra.mxu0 0
  %131 = vmatprep.subr.bf16.mxu0 0
  %132 = vmatpush1.bf16.msra.mxu0 0
  %133 = vmatprep.subr.bf16.mxu0 0
  %134 = vmatpush1.bf16.msra.mxu0 0
  %135 = vmatprep.subr.bf16.mxu0 0
  %136 = vmatpush1.bf16.msra.mxu0 0
  %137 = vmatprep.mubr.bf16.mxu0 0
  %138 = vmatmul.mubr.bf16.gmra.mrb[0].mxu0 %v55
  %v139 = vpop.f32.mrb[0].mxu0
  %v140 = vadd.f32 %v49, %v139
  %v141 = vpop.f32.mrb[0].mxu0
  %v142 = vpop.f32.mrb[0].mxu0
  %v143 = vadd.f32 %v49, %v142
  %v144 = vpop.f32.mrb[0].mxu0
  %145 = vdwg.mxu0
  %v146 = vlaneseq
  %v147 = vand.u32 %v146, 127
  %s148 = smul.u32 0, 128
  %v149 = vstv %s148
  %v150 = vadd.s32 %v147, %v149
  %vm151 = vcmp.lt.s32.totalorder %v150, 128
  %v152 = vsel %vm151, %v140, -3.4028235e+38
  %v153 = vsel %vm151, %v143, -3.4028235e+38
  %154 = vst [vmem:[%s3] sm:$0xff] %v152
  %155 = vst [vmem:[%s3 + $0x8] sm:$0xff] %v153
  %v156 = vld [vmem:[#allocation2] sm:$0xff]
  %v157 = vld [vmem:[#allocation2 + $0x8] sm:$0xff]
  %158 = vmax.xlane.f32.xlu0 %v152
  %v159 = vpop.xlane.xlu0 %158
  %160 = vmax.xlane.f32.xlu0 %v153
  %v161 = vpop.xlane.xlu0 %160
  %v162 = vmax.f32 %v156, %v159
  %v163 = vmax.f32 %v157, %v161
  %v164 = vld [vmem:[#allocation3] sm:$0xff]
  %v165 = vld [vmem:[#allocation3 + $0x8] sm:$0xff]
  %v166 = vsub.f32 %v156, %v162
  %v167 = vsub.f32 %v157, %v163
  %v168 = vmul.f32 %v166, 1.442695
  %v169 = vpow.pop %v168
  %v170 = vmul.f32 %v167, 1.442695
  %v171 = vpow.pop %v170
  %v172 = vmul.f32 %v164, %v169
  %v173 = vmul.f32 %v165, %v171
  %175 = vset.pattern.permute.xlu0 0
  %176 = vperm.xlu0 %175, %v162
  %v177 = vpop.permute.xlu0 %176
  %180 = vset.pattern.permute.xlu0 0
  %181 = vperm.xlu0 %180, %v163
  %v182 = vpop.permute.xlu0 %181
  %v184 = vsub.f32 %v152, %v177
  %v185 = vsub.f32 %v153, %v182
  %v186 = vmul.f32 %v184, 1.442695
  %v187 = vpow.pop %v186
  %v188 = vmul.f32 %v185, 1.442695
  %v189 = vpow.pop %v188
  %190 = vadd.xlane.f32.xlu0 %v187
  %v191 = vpop.xlane.xlu0 %190
  %192 = vadd.xlane.f32.xlu0 %v189
  %v193 = vpop.xlane.xlu0 %192
  %v194 = vadd.f32 %v172, %v191
  %v195 = vadd.f32 %v173, %v193
  %vm196 = vcmask 7168
  %197 = vst.msk [vmem:[#allocation3] sm:$0xff] %vm196, %v194
  %198 = vst.msk [vmem:[#allocation3 + $0x8] sm:$0xff] %vm196, %v195
  %199 = vst.msk [vmem:[#allocation2] sm:$0xff] %vm196, %v162
  %200 = vst.msk [vmem:[#allocation2 + $0x8] sm:$0xff] %vm196, %v163
  // Predicated region
  $region18: #{lstm_generator_forward.5} parent=0 // pred_check
    %p201 = pneg %p17
  $region19: #{lstm_generator_forward.5} parent=0 // pred_check_branch
    %203 = sbr.rel (%p201) target = $region21
  $region20: #{lstm_generator_forward.5} parent=0 // pred_region
    %v204 = vld [vmem:[#allocation2] sm:$0xff]
    %v205 = vld [vmem:[#allocation2 + $0x8] sm:$0xff]
    %v206 = vld [vmem:[#allocation3] sm:$0xff]
    %v207 = vld [vmem:[#allocation3 + $0x8] sm:$0xff]
    %v208 = vlog2.pop %v206
    %v209 = vmul.f32 %v208, 0.6931472
    %v210 = vlog2.pop %v207
    %v211 = vmul.f32 %v210, 0.6931472
    %v212 = vadd.f32 %v204, %v209
    %v213 = vadd.f32 %v205, %v211
    %214 = vst.msk [vmem:[%s4] sm:$0xff] %vm196, %v212
    %215 = vst.msk [vmem:[%s4 + $0x8] sm:$0xff] %vm196, %v213
  $region21: #{lstm_generator_forward.5} parent=0 // pred_fallthru
    _
  // Predicated region
  $region22: #{lstm_generator_forward.5} parent=0 // pred_check
    _
  $region23: #{lstm_generator_forward.5} parent=0 // pred_check_branch
    %217 = sbr.rel (0) target = $region25
  $region24: #{lstm_generator_forward.5} parent=0 // pred_region
    _
  $region25: #{lstm_generator_forward.5} parent=0 // pred_fallthru
    _
  // Predicated region
  $region26: #{lstm_generator_forward.5} parent=0 // pred_check
    _
  $region27: #{lstm_generator_forward.5} parent=0 // pred_check_branch
    %219 = sbr.rel (0) target = $region29
  $region28: #{lstm_generator_forward.5} parent=0 // pred_region
    _
  $region29: #{lstm_generator_forward.5} parent=0 // pred_fallthru
    _
  // Predicated region
  $region30: #{lstm_generator_forward.5} parent=0 // pred_check
    _
  $region31: #{lstm_generator_forward.5} parent=0 // pred_check_branch
    %221 = sbr.rel (0) target = $region33
  $region32: #{lstm_generator_forward.5} parent=0 // pred_region
    _
  $region33: #{lstm_generator_forward.5} parent=0 // pred_fallthru
    _
  // Predicated region
  $region34: #{lstm_generator_forward.5} parent=0 // pred_check
    _
  $region35: #{lstm_generator_forward.5} parent=0 // pred_check_branch
    %223 = sbr.rel (0) target = $region37
  $region36: #{lstm_generator_forward.5} parent=0 // pred_region
    _
  $region37: #{lstm_generator_forward.5} parent=0 // pred_fallthru
    _

</llo_original>
